<compile_context>
chip_gen: v7x
topology: tpu7x:2x2x1
jax: 0.10.0
libtpu: 0.0.40
codegen_flags: <defaults>
</compile_context>

<pallas_src>
import functools

import jax
import jax.numpy as jnp
from jax.experimental import pallas as pl
from jax.experimental.pallas import tpu as pltpu

_BN_EPS = 1e-5


# -------- fused [MaxPool2x2] + Conv3x3(pad=1, no bias) + BN(train) + ReLU --------
def _fused_layer_kernel(x_ref, w_ref, g_ref, b_ref, o_ref,
                        pad_ref, patch_ref, acc_ref, sum_ref, ssq_ref,
                        *, pool, n_batch, eps):
    b = pl.program_id(0)
    Cin = x_ref.shape[-1]
    Cout = o_ref.shape[-1]
    H, W = o_ref.shape[1], o_ref.shape[2]          # conv spatial dims (post-pool)
    rows = H * W

    @pl.when(b == 0)
    def _init():
        pad_ref[...] = jnp.zeros_like(pad_ref)     # halo border stays 0 afterwards
        sum_ref[...] = jnp.zeros_like(sum_ref)
        ssq_ref[...] = jnp.zeros_like(ssq_ref)

    # ---- fused MaxPool2d(kernel=2, stride=2) (layer 1 only) ----
    if pool:
        x00 = x_ref[pl.ds(0, H, 2), pl.ds(0, W, 2), :]
        x01 = x_ref[pl.ds(0, H, 2), pl.ds(1, W, 2), :]
        x10 = x_ref[pl.ds(1, H, 2), pl.ds(0, W, 2), :]
        x11 = x_ref[pl.ds(1, H, 2), pl.ds(1, W, 2), :]
        tile = jnp.maximum(jnp.maximum(x00, x01), jnp.maximum(x10, x11))
    else:
        tile = x_ref[...]                          # (H, W, Cin)

    # ---- pad=1 halo built in VMEM (no separate XLA pad / HBM round-trip) ----
    pad_ref[1:H + 1, 1:W + 1, :] = tile

    # ---- im2col: materialize the patch matrix ONCE, then a single MXU matmul ----
    for dy in range(3):
        for dx in range(3):
            k = dy * 3 + dx
            t = pad_ref[dy:dy + H, dx:dx + W, :]                  # (H, W, Cin)
            patch_ref[:, k * Cin:(k + 1) * Cin] = t.reshape(rows, Cin)

    patches = patch_ref[...].astype(jnp.bfloat16)                 # (rows, 9*Cin)
    acc = jnp.dot(patches, w_ref[...],                            # bf16 x bf16
                  preferred_element_type=jnp.float32)             # f32 accumulate

    # ---- one-pass BN statistics, accumulated across the batch grid ----
    sum_ref[...] += jnp.sum(acc, axis=0, keepdims=True)
    ssq_ref[...] += jnp.sum(acc * acc, axis=0, keepdims=True)

    # ---- stash pre-BN activations in the persistent f32 accumulator ----
    start = pl.multiple_of(b * rows, rows)
    acc_ref[pl.ds(start, rows), :] = acc

    # ---- finalize: BN (batch stats) + affine + ReLU as a single fused FMA ----
    @pl.when(b == n_batch - 1)
    def _finalize():
        inv_cnt = 1.0 / float(n_batch * rows)
        mean = sum_ref[...] * inv_cnt                             # (1, Cout)
        var = ssq_ref[...] * inv_cnt - mean * mean                # biased variance
        scale = g_ref[...] * jax.lax.rsqrt(var + eps)
        shift = b_ref[...] - mean * scale
        y = jnp.maximum(acc_ref[...] * scale + shift, 0.0)        # (N*rows, Cout)
        o_ref[...] = y.reshape(n_batch, H, W, Cout).astype(o_ref.dtype)


def _conv_bn_relu_layer(x_nhwc, w_hwio, gamma, beta, *, pool, eps=_BN_EPS):
    N, Hi, Wi, Cin = x_nhwc.shape
    Cout = w_hwio.shape[-1]
    if pool:
        assert Hi % 2 == 0 and Wi % 2 == 0, "MaxPool2d(2) needs even spatial dims"
        H, W = Hi // 2, Wi // 2
    else:
        H, W = Hi, Wi

    # weights reshaped once to (9*Cin, Cout), bf16 for the MXU
    w2d = w_hwio.reshape(9 * Cin, Cout).astype(jnp.bfloat16)
    kernel = functools.partial(_fused_layer_kernel, pool=pool, n_batch=N, eps=eps)

    return pl.pallas_call(
        kernel,
        out_shape=jax.ShapeDtypeStruct((N, H, W, Cout), x_nhwc.dtype),
        grid_spec=pltpu.PrefetchScalarGridSpec(
            num_scalar_prefetch=0,
            grid=(N,),
            in_specs=[
                # per-batch input block (pipeline double-buffers the DMA)
                pl.BlockSpec((None, Hi, Wi, Cin), lambda b: (b, 0, 0, 0)),
                # weights / BN affine params: small constants across the grid
                pl.BlockSpec((9 * Cin, Cout), lambda b: (0, 0)),
                pl.BlockSpec((1, Cout), lambda b: (0, 0)),
                pl.BlockSpec((1, Cout), lambda b: (0, 0)),
            ],
            # full output stays resident in VMEM across the ("arbitrary") batch
            # axis; it is written once, in the finalize step, after the global
            # BN statistics are known.
            out_specs=pl.BlockSpec((N, H, W, Cout), lambda b: (0, 0, 0, 0)),
            scratch_shapes=[
                pltpu.VMEM((H + 2, W + 2, Cin), jnp.float32),     # padded tile
                pltpu.VMEM((H * W, 9 * Cin), jnp.float32),        # im2col patches
                pltpu.VMEM((N * H * W, Cout), jnp.float32),       # pre-BN activations
                pltpu.VMEM((1, Cout), jnp.float32),               # BN sum
                pltpu.VMEM((1, Cout), jnp.float32),               # BN sum of squares
            ],
        ),
        compiler_params=pltpu.CompilerParams(
            dimension_semantics=("arbitrary",)),                  # BN global stats
    )(x_nhwc, w2d, gamma.reshape(1, Cout), beta.reshape(1, Cout))


# ------------------------------- EncodeDown -----------------------------------
@jax.jit
def encode_down(x_nhwc, params):
    y = _conv_bn_relu_layer(x_nhwc, params["w1"], params["g1"], params["b1"],
                            pool=True)    # fused MaxPool2d(2) + conv1 + BN + ReLU
    y = _conv_bn_relu_layer(y, params["w2"], params["g2"], params["b2"],
                            pool=False)   # conv2 + BN + ReLU
    return y


# ------------------------------ pure-JAX reference ----------------------------
def _ref_conv_bn_relu(x, w, gamma, beta, eps=_BN_EPS):
    y = jax.lax.conv_general_dilated(
        x, w, window_strides=(1, 1), padding="SAME",
        dimension_numbers=("NHWC", "HWIO", "NHWC"),
        precision=jax.lax.Precision.HIGHEST)
    mean = jnp.mean(y, axis=(0, 1, 2), keepdims=True)
    var = jnp.mean((y - mean) ** 2, axis=(0, 1, 2), keepdims=True)
    y = (y - mean) * jax.lax.rsqrt(var + eps) * gamma + beta
    return jnp.maximum(y, 0.0)


def _ref_encode_down(x, params):
    y = jax.lax.reduce_window(x, -jnp.inf, jax.lax.max,
                              (1, 2, 2, 1), (1, 2, 2, 1), "VALID")
    y = _ref_conv_bn_relu(y, params["w1"], params["g1"], params["b1"])
    y = _ref_conv_bn_relu(y, params["w2"], params["g2"], params["b2"])
    return y


if __name__ == "__main__":
    key = jax.random.PRNGKey(0)
    kx, k1, k2 = jax.random.split(key, 3)

    # EncodeDown(in_channel=4, out_channel=8) at small synthetic shapes.
    N, Cin, H, W = 2, 4, 16, 16
    Cmid = Cout = 8                           # mid_channel defaults to out_channel

    # PyTorch-convention NCHW input -> NHWC for the kernels
    x_nchw = jax.random.normal(kx, (N, Cin, H, W), jnp.float32)
    x_nhwc = jnp.transpose(x_nchw, (0, 2, 3, 1))

    # deterministic parameter init (Conv: HWIO, no bias; BN: gamma=1, beta=0)
    params = {
        "w1": 0.1 * jax.random.normal(k1, (3, 3, Cin, Cmid), jnp.float32),
        "g1": jnp.ones((Cmid,), jnp.float32),
        "b1": jnp.zeros((Cmid,), jnp.float32),
        "w2": 0.1 * jax.random.normal(k2, (3, 3, Cmid, Cout), jnp.float32),
        "g2": jnp.ones((Cout,), jnp.float32),
        "b2": jnp.zeros((Cout,), jnp.float32),
    }

    out = jax.block_until_ready(encode_down(x_nhwc, params))
    assert out.shape == (N, H // 2, W // 2, Cout), out.shape

    ref = jax.block_until_ready(_ref_encode_down(x_nhwc, params))
    # bf16 MXU inputs (f32 accumulation) vs the f32 HIGHEST-precision reference.
    if not jnp.allclose(out, ref, atol=2e-2, rtol=2e-2):
        raise SystemExit(
            f"MISMATCH: max abs err = {float(jnp.max(jnp.abs(out - ref)))}")
    print("KERNEL_OK")
</pallas_src>

<mosaic_0001>
module attributes {stable_mosaic.version = 11 : i64} {
  func.func @_fused_layer_kernel(%arg0: i32, %arg1: memref<1x16x16x4xf32, #tpu.memory_space<vmem>>, %arg2: memref<36x8xbf16, #tpu.memory_space<vmem>>, %arg3: memref<1x8xf32, #tpu.memory_space<vmem>>, %arg4: memref<1x8xf32, #tpu.memory_space<vmem>>, %arg5: memref<2x8x8x8xf32, #tpu.memory_space<vmem>>, %arg6: memref<10x10x4xf32, #tpu.memory_space<vmem>>, %arg7: memref<64x36xf32, #tpu.memory_space<vmem>>, %arg8: memref<128x8xf32, #tpu.memory_space<vmem>>, %arg9: memref<1x8xf32, #tpu.memory_space<vmem>>, %arg10: memref<1x8xf32, #tpu.memory_space<vmem>>) attributes {dimension_semantics = [#tpu.dimension_semantics<arbitrary>], iteration_bounds = array<i64: 2>, scalar_prefetch = 0 : i64, scratch_operands = 5 : i64, tpu.core_type = #tpu.core_type<tc>, window_params = [{transform_indices = @transform_0, window_bounds = array<i64: 1, 16, 16, 4>}, {pipeline_mode = #tpu.pipeline_mode<synchronous>, transform_indices = @transform_1, window_bounds = array<i64: 36, 8>}, {pipeline_mode = #tpu.pipeline_mode<synchronous>, transform_indices = @transform_2, window_bounds = array<i64: 1, 8>}, {pipeline_mode = #tpu.pipeline_mode<synchronous>, transform_indices = @transform_3, window_bounds = array<i64: 1, 8>}, {pipeline_mode = #tpu.pipeline_mode<synchronous>, transform_indices = @transform_4, window_bounds = array<i64: 2, 8, 8, 8>}]} {
    %c0_i32 = arith.constant 0 : i32
    %0 = arith.cmpi eq, %arg0, %c0_i32 : i32
    %1 = arith.extui %0 : i1 to i32
    %c0_i32_0 = arith.constant 0 : i32
    %2 = arith.cmpi ne, %1, %c0_i32_0 : i32
    scf.if %2 {
      %cst_70 = arith.constant 0.000000e+00 : f32
      %64 = vector.broadcast %cst_70 : f32 to vector<10x10x4xf32>
      %c0_71 = arith.constant 0 : index
      %c0_72 = arith.constant 0 : index
      %c0_73 = arith.constant 0 : index
      %65 = vector.load %arg6[%c0_71, %c0_72, %c0_73] : memref<10x10x4xf32, #tpu.memory_space<vmem>>, vector<10x10x4xf32>
      tpu.vector_store %arg6[%c0_71, %c0_72, %c0_73], %64 {strides = array<i32>} : memref<10x10x4xf32, #tpu.memory_space<vmem>>, vector<10x10x4xf32>,
      %cst_74 = arith.constant 0.000000e+00 : f32
      %66 = vector.broadcast %cst_74 : f32 to vector<1x8xf32>
      %c0_75 = arith.constant 0 : index
      %c0_76 = arith.constant 0 : index
      %67 = vector.load %arg9[%c0_75, %c0_76] : memref<1x8xf32, #tpu.memory_space<vmem>>, vector<1x8xf32>
      tpu.vector_store %arg9[%c0_75, %c0_76], %66 {strides = array<i32>} : memref<1x8xf32, #tpu.memory_space<vmem>>, vector<1x8xf32>,
      %cst_77 = arith.constant 0.000000e+00 : f32
      %68 = vector.broadcast %cst_77 : f32 to vector<1x8xf32>
      %c0_78 = arith.constant 0 : index
      %c0_79 = arith.constant 0 : index
      %69 = vector.load %arg10[%c0_78, %c0_79] : memref<1x8xf32, #tpu.memory_space<vmem>>, vector<1x8xf32>
      tpu.vector_store %arg10[%c0_78, %c0_79], %68 {strides = array<i32>} : memref<1x8xf32, #tpu.memory_space<vmem>>, vector<1x8xf32>,
    } else {
    }
    %c0 = arith.constant 0 : index
    %c0_1 = arith.constant 0 : index
    %c0_2 = arith.constant 0 : index
    %c0_3 = arith.constant 0 : index
    %3 = tpu.strided_load %arg1[%c0, %c0_1, %c0_2, %c0_3] {strides = array<i32: 1, 2, 2, 1>} : memref<1x16x16x4xf32, #tpu.memory_space<vmem>>, vector<1x8x8x4xf32>
    %4 = vector.shape_cast %3 : vector<1x8x8x4xf32> to vector<8x8x4xf32>
    %c0_4 = arith.constant 0 : index
    %c0_5 = arith.constant 0 : index
    %c1 = arith.constant 1 : index
    %c0_6 = arith.constant 0 : index
    %5 = tpu.strided_load %arg1[%c0_4, %c0_5, %c1, %c0_6] {strides = array<i32: 1, 2, 2, 1>} : memref<1x16x16x4xf32, #tpu.memory_space<vmem>>, vector<1x8x8x4xf32>
    %6 = vector.shape_cast %5 : vector<1x8x8x4xf32> to vector<8x8x4xf32>
    %c0_7 = arith.constant 0 : index
    %c1_8 = arith.constant 1 : index
    %c0_9 = arith.constant 0 : index
    %c0_10 = arith.constant 0 : index
    %7 = tpu.strided_load %arg1[%c0_7, %c1_8, %c0_9, %c0_10] {strides = array<i32: 1, 2, 2, 1>} : memref<1x16x16x4xf32, #tpu.memory_space<vmem>>, vector<1x8x8x4xf32>
    %8 = vector.shape_cast %7 : vector<1x8x8x4xf32> to vector<8x8x4xf32>
    %c0_11 = arith.constant 0 : index
    %c1_12 = arith.constant 1 : index
    %c1_13 = arith.constant 1 : index
    %c0_14 = arith.constant 0 : index
    %9 = tpu.strided_load %arg1[%c0_11, %c1_12, %c1_13, %c0_14] {strides = array<i32: 1, 2, 2, 1>} : memref<1x16x16x4xf32, #tpu.memory_space<vmem>>, vector<1x8x8x4xf32>
    %10 = vector.shape_cast %9 : vector<1x8x8x4xf32> to vector<8x8x4xf32>
    %11 = arith.maximumf %4, %6 : vector<8x8x4xf32>
    %12 = arith.maximumf %8, %10 : vector<8x8x4xf32>
    %13 = arith.maximumf %11, %12 : vector<8x8x4xf32>
    %c1_15 = arith.constant 1 : index
    %c1_16 = arith.constant 1 : index
    %c0_17 = arith.constant 0 : index
    %14 = vector.load %arg6[%c1_15, %c1_16, %c0_17] : memref<10x10x4xf32, #tpu.memory_space<vmem>>, vector<8x8x4xf32>
    tpu.vector_store %arg6[%c1_15, %c1_16, %c0_17], %13 {strides = array<i32>} : memref<10x10x4xf32, #tpu.memory_space<vmem>>, vector<8x8x4xf32>,
    %c0_18 = arith.constant 0 : index
    %c0_19 = arith.constant 0 : index
    %c0_20 = arith.constant 0 : index
    %15 = vector.load %arg6[%c0_18, %c0_19, %c0_20] : memref<10x10x4xf32, #tpu.memory_space<vmem>>, vector<8x8x4xf32>
    %16 = vector.shape_cast %15 : vector<8x8x4xf32> to vector<64x4xf32>
    %c0_21 = arith.constant 0 : index
    %c0_22 = arith.constant 0 : index
    %17 = vector.load %arg7[%c0_21, %c0_22] : memref<64x36xf32, #tpu.memory_space<vmem>>, vector<64x4xf32>
    tpu.vector_store %arg7[%c0_21, %c0_22], %16 {strides = array<i32>} : memref<64x36xf32, #tpu.memory_space<vmem>>, vector<64x4xf32>,
    %c0_23 = arith.constant 0 : index
    %c1_24 = arith.constant 1 : index
    %c0_25 = arith.constant 0 : index
    %18 = vector.load %arg6[%c0_23, %c1_24, %c0_25] : memref<10x10x4xf32, #tpu.memory_space<vmem>>, vector<8x8x4xf32>
    %19 = vector.shape_cast %18 : vector<8x8x4xf32> to vector<64x4xf32>
    %c0_26 = arith.constant 0 : index
    %c4 = arith.constant 4 : index
    %20 = vector.load %arg7[%c0_26, %c4] : memref<64x36xf32, #tpu.memory_space<vmem>>, vector<64x4xf32>
    tpu.vector_store %arg7[%c0_26, %c4], %19 {strides = array<i32>} : memref<64x36xf32, #tpu.memory_space<vmem>>, vector<64x4xf32>,
    %c0_27 = arith.constant 0 : index
    %c2 = arith.constant 2 : index
    %c0_28 = arith.constant 0 : index
    %21 = vector.load %arg6[%c0_27, %c2, %c0_28] : memref<10x10x4xf32, #tpu.memory_space<vmem>>, vector<8x8x4xf32>
    %22 = vector.shape_cast %21 : vector<8x8x4xf32> to vector<64x4xf32>
    %c0_29 = arith.constant 0 : index
    %c8 = arith.constant 8 : index
    %23 = vector.load %arg7[%c0_29, %c8] : memref<64x36xf32, #tpu.memory_space<vmem>>, vector<64x4xf32>
    tpu.vector_store %arg7[%c0_29, %c8], %22 {strides = array<i32>} : memref<64x36xf32, #tpu.memory_space<vmem>>, vector<64x4xf32>,
    %c1_30 = arith.constant 1 : index
    %c0_31 = arith.constant 0 : index
    %c0_32 = arith.constant 0 : index
    %24 = vector.load %arg6[%c1_30, %c0_31, %c0_32] : memref<10x10x4xf32, #tpu.memory_space<vmem>>, vector<8x8x4xf32>
    %25 = vector.shape_cast %24 : vector<8x8x4xf32> to vector<64x4xf32>
    %c0_33 = arith.constant 0 : index
    %c12 = arith.constant 12 : index
    %26 = vector.load %arg7[%c0_33, %c12] : memref<64x36xf32, #tpu.memory_space<vmem>>, vector<64x4xf32>
    tpu.vector_store %arg7[%c0_33, %c12], %25 {strides = array<i32>} : memref<64x36xf32, #tpu.memory_space<vmem>>, vector<64x4xf32>,
    %c1_34 = arith.constant 1 : index
    %c1_35 = arith.constant 1 : index
    %c0_36 = arith.constant 0 : index
    %27 = vector.load %arg6[%c1_34, %c1_35, %c0_36] : memref<10x10x4xf32, #tpu.memory_space<vmem>>, vector<8x8x4xf32>
    %28 = vector.shape_cast %27 : vector<8x8x4xf32> to vector<64x4xf32>
    %c0_37 = arith.constant 0 : index
    %c16 = arith.constant 16 : index
    %29 = vector.load %arg7[%c0_37, %c16] : memref<64x36xf32, #tpu.memory_space<vmem>>, vector<64x4xf32>
    tpu.vector_store %arg7[%c0_37, %c16], %28 {strides = array<i32>} : memref<64x36xf32, #tpu.memory_space<vmem>>, vector<64x4xf32>,
    %c1_38 = arith.constant 1 : index
    %c2_39 = arith.constant 2 : index
    %c0_40 = arith.constant 0 : index
    %30 = vector.load %arg6[%c1_38, %c2_39, %c0_40] : memref<10x10x4xf32, #tpu.memory_space<vmem>>, vector<8x8x4xf32>
    %31 = vector.shape_cast %30 : vector<8x8x4xf32> to vector<64x4xf32>
    %c0_41 = arith.constant 0 : index
    %c20 = arith.constant 20 : index
    %32 = vector.load %arg7[%c0_41, %c20] : memref<64x36xf32, #tpu.memory_space<vmem>>, vector<64x4xf32>
    tpu.vector_store %arg7[%c0_41, %c20], %31 {strides = array<i32>} : memref<64x36xf32, #tpu.memory_space<vmem>>, vector<64x4xf32>,
    %c2_42 = arith.constant 2 : index
    %c0_43 = arith.constant 0 : index
    %c0_44 = arith.constant 0 : index
    %33 = vector.load %arg6[%c2_42, %c0_43, %c0_44] : memref<10x10x4xf32, #tpu.memory_space<vmem>>, vector<8x8x4xf32>
    %34 = vector.shape_cast %33 : vector<8x8x4xf32> to vector<64x4xf32>
    %c0_45 = arith.constant 0 : index
    %c24 = arith.constant 24 : index
    %35 = vector.load %arg7[%c0_45, %c24] : memref<64x36xf32, #tpu.memory_space<vmem>>, vector<64x4xf32>
    tpu.vector_store %arg7[%c0_45, %c24], %34 {strides = array<i32>} : memref<64x36xf32, #tpu.memory_space<vmem>>, vector<64x4xf32>,
    %c2_46 = arith.constant 2 : index
    %c1_47 = arith.constant 1 : index
    %c0_48 = arith.constant 0 : index
    %36 = vector.load %arg6[%c2_46, %c1_47, %c0_48] : memref<10x10x4xf32, #tpu.memory_space<vmem>>, vector<8x8x4xf32>
    %37 = vector.shape_cast %36 : vector<8x8x4xf32> to vector<64x4xf32>
    %c0_49 = arith.constant 0 : index
    %c28 = arith.constant 28 : index
    %38 = vector.load %arg7[%c0_49, %c28] : memref<64x36xf32, #tpu.memory_space<vmem>>, vector<64x4xf32>
    tpu.vector_store %arg7[%c0_49, %c28], %37 {strides = array<i32>} : memref<64x36xf32, #tpu.memory_space<vmem>>, vector<64x4xf32>,
    %c2_50 = arith.constant 2 : index
    %c2_51 = arith.constant 2 : index
    %c0_52 = arith.constant 0 : index
    %39 = vector.load %arg6[%c2_50, %c2_51, %c0_52] : memref<10x10x4xf32, #tpu.memory_space<vmem>>, vector<8x8x4xf32>
    %40 = vector.shape_cast %39 : vector<8x8x4xf32> to vector<64x4xf32>
    %c0_53 = arith.constant 0 : index
    %c32 = arith.constant 32 : index
    %41 = vector.load %arg7[%c0_53, %c32] : memref<64x36xf32, #tpu.memory_space<vmem>>, vector<64x4xf32>
    tpu.vector_store %arg7[%c0_53, %c32], %40 {strides = array<i32>} : memref<64x36xf32, #tpu.memory_space<vmem>>, vector<64x4xf32>,
    %c0_54 = arith.constant 0 : index
    %c0_55 = arith.constant 0 : index
    %42 = vector.load %arg7[%c0_54, %c0_55] : memref<64x36xf32, #tpu.memory_space<vmem>>, vector<64x36xf32>
    %43 = arith.truncf %42 : vector<64x36xf32> to vector<64x36xbf16>
    %c0_56 = arith.constant 0 : index
    %c0_57 = arith.constant 0 : index
    %44 = vector.load %arg2[%c0_56, %c0_57] : memref<36x8xbf16, #tpu.memory_space<vmem>>, vector<36x8xbf16>
    %cst = arith.constant dense<0.000000e+00> : vector<64x8xf32>
    %45 = tpu.matmul %43, %44, %cst {dimension_numbers = #tpu.dot_dimension_numbers<[1], [0], [0], [1], [0, 0, 1, 1], [], []>} : vector<64x36xbf16>, vector<36x8xbf16>, vector<64x8xf32> -> vector<64x8xf32>
    %c0_58 = arith.constant 0 : index
    %c0_59 = arith.constant 0 : index
    %46 = vector.load %arg9[%c0_58, %c0_59] : memref<1x8xf32, #tpu.memory_space<vmem>>, vector<1x8xf32>
    %cst_60 = arith.constant dense<0.000000e+00> : vector<8xf32>
    %47 = vector.multi_reduction <add>, %45, %cst_60 [0] : vector<64x8xf32> to vector<8xf32>
    %48 = vector.shape_cast %47 : vector<8xf32> to vector<1x8xf32>
    %49 = arith.addf %46, %48 : vector<1x8xf32>
    %c0_61 = arith.constant 0 : index
    %c0_62 = arith.constant 0 : index
    %50 = vector.load %arg9[%c0_61, %c0_62] : memref<1x8xf32, #tpu.memory_space<vmem>>, vector<1x8xf32>
    tpu.vector_store %arg9[%c0_61, %c0_62], %49 {strides = array<i32>} : memref<1x8xf32, #tpu.memory_space<vmem>>, vector<1x8xf32>,
    %c0_63 = arith.constant 0 : index
    %c0_64 = arith.constant 0 : index
    %51 = vector.load %arg10[%c0_63, %c0_64] : memref<1x8xf32, #tpu.memory_space<vmem>>, vector<1x8xf32>
    %52 = arith.mulf %45, %45 : vector<64x8xf32>
    %cst_65 = arith.constant dense<0.000000e+00> : vector<8xf32>
    %53 = vector.multi_reduction <add>, %52, %cst_65 [0] : vector<64x8xf32> to vector<8xf32>
    %54 = vector.shape_cast %53 : vector<8xf32> to vector<1x8xf32>
    %55 = arith.addf %51, %54 : vector<1x8xf32>
    %c0_66 = arith.constant 0 : index
    %c0_67 = arith.constant 0 : index
    %56 = vector.load %arg10[%c0_66, %c0_67] : memref<1x8xf32, #tpu.memory_space<vmem>>, vector<1x8xf32>
    tpu.vector_store %arg10[%c0_66, %c0_67], %55 {strides = array<i32>} : memref<1x8xf32, #tpu.memory_space<vmem>>, vector<1x8xf32>,
    %c64_i32 = arith.constant 64 : i32
    %57 = arith.muli %arg0, %c64_i32 : i32
    %58 = tpu.assume_multiple %57, 64 : i32
    %59 = arith.index_cast %58 : i32 to index
    %c0_68 = arith.constant 0 : index
    %60 = vector.load %arg8[%59, %c0_68] : memref<128x8xf32, #tpu.memory_space<vmem>>, vector<64x8xf32>
    tpu.vector_store %arg8[%59, %c0_68], %45 {strides = array<i32>} : memref<128x8xf32, #tpu.memory_space<vmem>>, vector<64x8xf32>,
    %c1_i32 = arith.constant 1 : i32
    %61 = arith.cmpi eq, %arg0, %c1_i32 : i32
    %62 = arith.extui %61 : i1 to i32
    %c0_i32_69 = arith.constant 0 : i32
    %63 = arith.cmpi ne, %62, %c0_i32_69 : i32
    scf.if %63 {
      %c0_70 = arith.constant 0 : index
      %c0_71 = arith.constant 0 : index
      %64 = vector.load %arg9[%c0_70, %c0_71] : memref<1x8xf32, #tpu.memory_space<vmem>>, vector<1x8xf32>
      %cst_72 = arith.constant 7.812500e-03 : f32
      %65 = vector.broadcast %cst_72 : f32 to vector<1x8xf32>
      %66 = arith.mulf %64, %65 : vector<1x8xf32>
      %c0_73 = arith.constant 0 : index
      %c0_74 = arith.constant 0 : index
      %67 = vector.load %arg10[%c0_73, %c0_74] : memref<1x8xf32, #tpu.memory_space<vmem>>, vector<1x8xf32>
      %cst_75 = arith.constant 7.812500e-03 : f32
      %68 = vector.broadcast %cst_75 : f32 to vector<1x8xf32>
      %69 = arith.mulf %67, %68 : vector<1x8xf32>
      %70 = arith.mulf %66, %66 : vector<1x8xf32>
      %71 = arith.subf %69, %70 : vector<1x8xf32>
      %c0_76 = arith.constant 0 : index
      %c0_77 = arith.constant 0 : index
      %72 = vector.load %arg3[%c0_76, %c0_77] : memref<1x8xf32, #tpu.memory_space<vmem>>, vector<1x8xf32>
      %cst_78 = arith.constant 9.99999974E-6 : f32
      %73 = vector.broadcast %cst_78 : f32 to vector<1x8xf32>
      %74 = arith.addf %71, %73 : vector<1x8xf32>
      %75 = math.rsqrt %74 : vector<1x8xf32>
      %76 = arith.mulf %72, %75 : vector<1x8xf32>
      %c0_79 = arith.constant 0 : index
      %c0_80 = arith.constant 0 : index
      %77 = vector.load %arg4[%c0_79, %c0_80] : memref<1x8xf32, #tpu.memory_space<vmem>>, vector<1x8xf32>
      %78 = arith.mulf %66, %76 : vector<1x8xf32>
      %79 = arith.subf %77, %78 : vector<1x8xf32>
      %c0_81 = arith.constant 0 : index
      %c0_82 = arith.constant 0 : index
      %80 = vector.load %arg8[%c0_81, %c0_82] : memref<128x8xf32, #tpu.memory_space<vmem>>, vector<128x8xf32>
      %81 = vector.broadcast %76 : vector<1x8xf32> to vector<128x8xf32>
      %82 = arith.mulf %80, %81 : vector<128x8xf32>
      %83 = vector.broadcast %79 : vector<1x8xf32> to vector<128x8xf32>
      %84 = arith.addf %82, %83 : vector<128x8xf32>
      %cst_83 = arith.constant 0.000000e+00 : f32
      %85 = vector.broadcast %cst_83 : f32 to vector<128x8xf32>
      %86 = arith.maximumf %84, %85 : vector<128x8xf32>
      %87 = vector.shape_cast %86 : vector<128x8xf32> to vector<2x8x8x8xf32>
      %c0_84 = arith.constant 0 : index
      %c0_85 = arith.constant 0 : index
      %c0_86 = arith.constant 0 : index
      %c0_87 = arith.constant 0 : index
      %88 = vector.load %arg5[%c0_84, %c0_85, %c0_86, %c0_87] : memref<2x8x8x8xf32, #tpu.memory_space<vmem>>, vector<2x8x8x8xf32>
      tpu.vector_store %arg5[%c0_84, %c0_85, %c0_86, %c0_87], %87 {strides = array<i32>} : memref<2x8x8x8xf32, #tpu.memory_space<vmem>>, vector<2x8x8x8xf32>,
    } else {
    }
    return
  }
  func.func @transform_0(%arg0: i32) -> (i32, i32, i32, i32) {
    %c0_i32 = arith.constant 0 : i32
    %c0_i32_0 = arith.constant 0 : i32
    %c0_i32_1 = arith.constant 0 : i32
    %c0_i32_2 = arith.constant 0 : i32
    return %arg0, %c0_i32, %c0_i32_0, %c0_i32_1 : i32, i32, i32, i32
  }
  func.func @transform_1(%arg0: i32) -> (i32, i32) {
    %c0_i32 = arith.constant 0 : i32
    %c0_i32_0 = arith.constant 0 : i32
    %c0_i32_1 = arith.constant 0 : i32
    return %c0_i32, %c0_i32_0 : i32, i32
  }
  func.func @transform_2(%arg0: i32) -> (i32, i32) {
    %c0_i32 = arith.constant 0 : i32
    %c0_i32_0 = arith.constant 0 : i32
    %c0_i32_1 = arith.constant 0 : i32
    return %c0_i32, %c0_i32_0 : i32, i32
  }
  func.func @transform_3(%arg0: i32) -> (i32, i32) {
    %c0_i32 = arith.constant 0 : i32
    %c0_i32_0 = arith.constant 0 : i32
    %c0_i32_1 = arith.constant 0 : i32
    return %c0_i32, %c0_i32_0 : i32, i32
  }
  func.func @transform_4(%arg0: i32) -> (i32, i32, i32, i32) {
    %c0_i32 = arith.constant 0 : i32
    %c0_i32_0 = arith.constant 0 : i32
    %c0_i32_1 = arith.constant 0 : i32
    %c0_i32_2 = arith.constant 0 : i32
    %c0_i32_3 = arith.constant 0 : i32
    return %c0_i32, %c0_i32_0, %c0_i32_1, %c0_i32_2 : i32, i32, i32, i32
  }
}

module attributes {stable_mosaic.version = 11 : i64} {
  func.func @_fused_layer_kernel(%arg0: i32, %arg1: memref<1x8x8x8xf32, #tpu.memory_space<vmem>>, %arg2: memref<72x8xbf16, #tpu.memory_space<vmem>>, %arg3: memref<1x8xf32, #tpu.memory_space<vmem>>, %arg4: memref<1x8xf32, #tpu.memory_space<vmem>>, %arg5: memref<2x8x8x8xf32, #tpu.memory_space<vmem>>, %arg6: memref<10x10x8xf32, #tpu.memory_space<vmem>>, %arg7: memref<64x72xf32, #tpu.memory_space<vmem>>, %arg8: memref<128x8xf32, #tpu.memory_space<vmem>>, %arg9: memref<1x8xf32, #tpu.memory_space<vmem>>, %arg10: memref<1x8xf32, #tpu.memory_space<vmem>>) attributes {dimension_semantics = [#tpu.dimension_semantics<arbitrary>], iteration_bounds = array<i64: 2>, scalar_prefetch = 0 : i64, scratch_operands = 5 : i64, tpu.core_type = #tpu.core_type<tc>, window_params = [{transform_indices = @transform_0, window_bounds = array<i64: 1, 8, 8, 8>}, {pipeline_mode = #tpu.pipeline_mode<synchronous>, transform_indices = @transform_1, window_bounds = array<i64: 72, 8>}, {pipeline_mode = #tpu.pipeline_mode<synchronous>, transform_indices = @transform_2, window_bounds = array<i64: 1, 8>}, {pipeline_mode = #tpu.pipeline_mode<synchronous>, transform_indices = @transform_3, window_bounds = array<i64: 1, 8>}, {pipeline_mode = #tpu.pipeline_mode<synchronous>, transform_indices = @transform_4, window_bounds = array<i64: 2, 8, 8, 8>}]} {
    %c0_i32 = arith.constant 0 : i32
    %0 = arith.cmpi eq, %arg0, %c0_i32 : i32
    %1 = arith.extui %0 : i1 to i32
    %c0_i32_0 = arith.constant 0 : i32
    %2 = arith.cmpi ne, %1, %c0_i32_0 : i32
    scf.if %2 {
      %cst_58 = arith.constant 0.000000e+00 : f32
      %55 = vector.broadcast %cst_58 : f32 to vector<10x10x8xf32>
      %c0_59 = arith.constant 0 : index
      %c0_60 = arith.constant 0 : index
      %c0_61 = arith.constant 0 : index
      %56 = vector.load %arg6[%c0_59, %c0_60, %c0_61] : memref<10x10x8xf32, #tpu.memory_space<vmem>>, vector<10x10x8xf32>
      tpu.vector_store %arg6[%c0_59, %c0_60, %c0_61], %55 {strides = array<i32>} : memref<10x10x8xf32, #tpu.memory_space<vmem>>, vector<10x10x8xf32>,
      %cst_62 = arith.constant 0.000000e+00 : f32
      %57 = vector.broadcast %cst_62 : f32 to vector<1x8xf32>
      %c0_63 = arith.constant 0 : index
      %c0_64 = arith.constant 0 : index
      %58 = vector.load %arg9[%c0_63, %c0_64] : memref<1x8xf32, #tpu.memory_space<vmem>>, vector<1x8xf32>
      tpu.vector_store %arg9[%c0_63, %c0_64], %57 {strides = array<i32>} : memref<1x8xf32, #tpu.memory_space<vmem>>, vector<1x8xf32>,
      %cst_65 = arith.constant 0.000000e+00 : f32
      %59 = vector.broadcast %cst_65 : f32 to vector<1x8xf32>
      %c0_66 = arith.constant 0 : index
      %c0_67 = arith.constant 0 : index
      %60 = vector.load %arg10[%c0_66, %c0_67] : memref<1x8xf32, #tpu.memory_space<vmem>>, vector<1x8xf32>
      tpu.vector_store %arg10[%c0_66, %c0_67], %59 {strides = array<i32>} : memref<1x8xf32, #tpu.memory_space<vmem>>, vector<1x8xf32>,
    } else {
    }
    %c0 = arith.constant 0 : index
    %c0_1 = arith.constant 0 : index
    %c0_2 = arith.constant 0 : index
    %c0_3 = arith.constant 0 : index
    %3 = vector.load %arg1[%c0, %c0_1, %c0_2, %c0_3] : memref<1x8x8x8xf32, #tpu.memory_space<vmem>>, vector<1x8x8x8xf32>
    %4 = vector.shape_cast %3 : vector<1x8x8x8xf32> to vector<8x8x8xf32>
    %c1 = arith.constant 1 : index
    %c1_4 = arith.constant 1 : index
    %c0_5 = arith.constant 0 : index
    %5 = vector.load %arg6[%c1, %c1_4, %c0_5] : memref<10x10x8xf32, #tpu.memory_space<vmem>>, vector<8x8x8xf32>
    tpu.vector_store %arg6[%c1, %c1_4, %c0_5], %4 {strides = array<i32>} : memref<10x10x8xf32, #tpu.memory_space<vmem>>, vector<8x8x8xf32>,
    %c0_6 = arith.constant 0 : index
    %c0_7 = arith.constant 0 : index
    %c0_8 = arith.constant 0 : index
    %6 = vector.load %arg6[%c0_6, %c0_7, %c0_8] : memref<10x10x8xf32, #tpu.memory_space<vmem>>, vector<8x8x8xf32>
    %7 = vector.shape_cast %6 : vector<8x8x8xf32> to vector<64x8xf32>
    %c0_9 = arith.constant 0 : index
    %c0_10 = arith.constant 0 : index
    %8 = vector.load %arg7[%c0_9, %c0_10] : memref<64x72xf32, #tpu.memory_space<vmem>>, vector<64x8xf32>
    tpu.vector_store %arg7[%c0_9, %c0_10], %7 {strides = array<i32>} : memref<64x72xf32, #tpu.memory_space<vmem>>, vector<64x8xf32>,
    %c0_11 = arith.constant 0 : index
    %c1_12 = arith.constant 1 : index
    %c0_13 = arith.constant 0 : index
    %9 = vector.load %arg6[%c0_11, %c1_12, %c0_13] : memref<10x10x8xf32, #tpu.memory_space<vmem>>, vector<8x8x8xf32>
    %10 = vector.shape_cast %9 : vector<8x8x8xf32> to vector<64x8xf32>
    %c0_14 = arith.constant 0 : index
    %c8 = arith.constant 8 : index
    %11 = vector.load %arg7[%c0_14, %c8] : memref<64x72xf32, #tpu.memory_space<vmem>>, vector<64x8xf32>
    tpu.vector_store %arg7[%c0_14, %c8], %10 {strides = array<i32>} : memref<64x72xf32, #tpu.memory_space<vmem>>, vector<64x8xf32>,
    %c0_15 = arith.constant 0 : index
    %c2 = arith.constant 2 : index
    %c0_16 = arith.constant 0 : index
    %12 = vector.load %arg6[%c0_15, %c2, %c0_16] : memref<10x10x8xf32, #tpu.memory_space<vmem>>, vector<8x8x8xf32>
    %13 = vector.shape_cast %12 : vector<8x8x8xf32> to vector<64x8xf32>
    %c0_17 = arith.constant 0 : index
    %c16 = arith.constant 16 : index
    %14 = vector.load %arg7[%c0_17, %c16] : memref<64x72xf32, #tpu.memory_space<vmem>>, vector<64x8xf32>
    tpu.vector_store %arg7[%c0_17, %c16], %13 {strides = array<i32>} : memref<64x72xf32, #tpu.memory_space<vmem>>, vector<64x8xf32>,
    %c1_18 = arith.constant 1 : index
    %c0_19 = arith.constant 0 : index
    %c0_20 = arith.constant 0 : index
    %15 = vector.load %arg6[%c1_18, %c0_19, %c0_20] : memref<10x10x8xf32, #tpu.memory_space<vmem>>, vector<8x8x8xf32>
    %16 = vector.shape_cast %15 : vector<8x8x8xf32> to vector<64x8xf32>
    %c0_21 = arith.constant 0 : index
    %c24 = arith.constant 24 : index
    %17 = vector.load %arg7[%c0_21, %c24] : memref<64x72xf32, #tpu.memory_space<vmem>>, vector<64x8xf32>
    tpu.vector_store %arg7[%c0_21, %c24], %16 {strides = array<i32>} : memref<64x72xf32, #tpu.memory_space<vmem>>, vector<64x8xf32>,
    %c1_22 = arith.constant 1 : index
    %c1_23 = arith.constant 1 : index
    %c0_24 = arith.constant 0 : index
    %18 = vector.load %arg6[%c1_22, %c1_23, %c0_24] : memref<10x10x8xf32, #tpu.memory_space<vmem>>, vector<8x8x8xf32>
    %19 = vector.shape_cast %18 : vector<8x8x8xf32> to vector<64x8xf32>
    %c0_25 = arith.constant 0 : index
    %c32 = arith.constant 32 : index
    %20 = vector.load %arg7[%c0_25, %c32] : memref<64x72xf32, #tpu.memory_space<vmem>>, vector<64x8xf32>
    tpu.vector_store %arg7[%c0_25, %c32], %19 {strides = array<i32>} : memref<64x72xf32, #tpu.memory_space<vmem>>, vector<64x8xf32>,
    %c1_26 = arith.constant 1 : index
    %c2_27 = arith.constant 2 : index
    %c0_28 = arith.constant 0 : index
    %21 = vector.load %arg6[%c1_26, %c2_27, %c0_28] : memref<10x10x8xf32, #tpu.memory_space<vmem>>, vector<8x8x8xf32>
    %22 = vector.shape_cast %21 : vector<8x8x8xf32> to vector<64x8xf32>
    %c0_29 = arith.constant 0 : index
    %c40 = arith.constant 40 : index
    %23 = vector.load %arg7[%c0_29, %c40] : memref<64x72xf32, #tpu.memory_space<vmem>>, vector<64x8xf32>
    tpu.vector_store %arg7[%c0_29, %c40], %22 {strides = array<i32>} : memref<64x72xf32, #tpu.memory_space<vmem>>, vector<64x8xf32>,
    %c2_30 = arith.constant 2 : index
    %c0_31 = arith.constant 0 : index
    %c0_32 = arith.constant 0 : index
    %24 = vector.load %arg6[%c2_30, %c0_31, %c0_32] : memref<10x10x8xf32, #tpu.memory_space<vmem>>, vector<8x8x8xf32>
    %25 = vector.shape_cast %24 : vector<8x8x8xf32> to vector<64x8xf32>
    %c0_33 = arith.constant 0 : index
    %c48 = arith.constant 48 : index
    %26 = vector.load %arg7[%c0_33, %c48] : memref<64x72xf32, #tpu.memory_space<vmem>>, vector<64x8xf32>
    tpu.vector_store %arg7[%c0_33, %c48], %25 {strides = array<i32>} : memref<64x72xf32, #tpu.memory_space<vmem>>, vector<64x8xf32>,
    %c2_34 = arith.constant 2 : index
    %c1_35 = arith.constant 1 : index
    %c0_36 = arith.constant 0 : index
    %27 = vector.load %arg6[%c2_34, %c1_35, %c0_36] : memref<10x10x8xf32, #tpu.memory_space<vmem>>, vector<8x8x8xf32>
    %28 = vector.shape_cast %27 : vector<8x8x8xf32> to vector<64x8xf32>
    %c0_37 = arith.constant 0 : index
    %c56 = arith.constant 56 : index
    %29 = vector.load %arg7[%c0_37, %c56] : memref<64x72xf32, #tpu.memory_space<vmem>>, vector<64x8xf32>
    tpu.vector_store %arg7[%c0_37, %c56], %28 {strides = array<i32>} : memref<64x72xf32, #tpu.memory_space<vmem>>, vector<64x8xf32>,
    %c2_38 = arith.constant 2 : index
    %c2_39 = arith.constant 2 : index
    %c0_40 = arith.constant 0 : index
    %30 = vector.load %arg6[%c2_38, %c2_39, %c0_40] : memref<10x10x8xf32, #tpu.memory_space<vmem>>, vector<8x8x8xf32>
    %31 = vector.shape_cast %30 : vector<8x8x8xf32> to vector<64x8xf32>
    %c0_41 = arith.constant 0 : index
    %c64 = arith.constant 64 : index
    %32 = vector.load %arg7[%c0_41, %c64] : memref<64x72xf32, #tpu.memory_space<vmem>>, vector<64x8xf32>
    tpu.vector_store %arg7[%c0_41, %c64], %31 {strides = array<i32>} : memref<64x72xf32, #tpu.memory_space<vmem>>, vector<64x8xf32>,
    %c0_42 = arith.constant 0 : index
    %c0_43 = arith.constant 0 : index
    %33 = vector.load %arg7[%c0_42, %c0_43] : memref<64x72xf32, #tpu.memory_space<vmem>>, vector<64x72xf32>
    %34 = arith.truncf %33 : vector<64x72xf32> to vector<64x72xbf16>
    %c0_44 = arith.constant 0 : index
    %c0_45 = arith.constant 0 : index
    %35 = vector.load %arg2[%c0_44, %c0_45] : memref<72x8xbf16, #tpu.memory_space<vmem>>, vector<72x8xbf16>
    %cst = arith.constant dense<0.000000e+00> : vector<64x8xf32>
    %36 = tpu.matmul %34, %35, %cst {dimension_numbers = #tpu.dot_dimension_numbers<[1], [0], [0], [1], [0, 0, 1, 1], [], []>} : vector<64x72xbf16>, vector<72x8xbf16>, vector<64x8xf32> -> vector<64x8xf32>
    %c0_46 = arith.constant 0 : index
    %c0_47 = arith.constant 0 : index
    %37 = vector.load %arg9[%c0_46, %c0_47] : memref<1x8xf32, #tpu.memory_space<vmem>>, vector<1x8xf32>
    %cst_48 = arith.constant dense<0.000000e+00> : vector<8xf32>
    %38 = vector.multi_reduction <add>, %36, %cst_48 [0] : vector<64x8xf32> to vector<8xf32>
    %39 = vector.shape_cast %38 : vector<8xf32> to vector<1x8xf32>
    %40 = arith.addf %37, %39 : vector<1x8xf32>
    %c0_49 = arith.constant 0 : index
    %c0_50 = arith.constant 0 : index
    %41 = vector.load %arg9[%c0_49, %c0_50] : memref<1x8xf32, #tpu.memory_space<vmem>>, vector<1x8xf32>
    tpu.vector_store %arg9[%c0_49, %c0_50], %40 {strides = array<i32>} : memref<1x8xf32, #tpu.memory_space<vmem>>, vector<1x8xf32>,
    %c0_51 = arith.constant 0 : index
    %c0_52 = arith.constant 0 : index
    %42 = vector.load %arg10[%c0_51, %c0_52] : memref<1x8xf32, #tpu.memory_space<vmem>>, vector<1x8xf32>
    %43 = arith.mulf %36, %36 : vector<64x8xf32>
    %cst_53 = arith.constant dense<0.000000e+00> : vector<8xf32>
    %44 = vector.multi_reduction <add>, %43, %cst_53 [0] : vector<64x8xf32> to vector<8xf32>
    %45 = vector.shape_cast %44 : vector<8xf32> to vector<1x8xf32>
    %46 = arith.addf %42, %45 : vector<1x8xf32>
    %c0_54 = arith.constant 0 : index
    %c0_55 = arith.constant 0 : index
    %47 = vector.load %arg10[%c0_54, %c0_55] : memref<1x8xf32, #tpu.memory_space<vmem>>, vector<1x8xf32>
    tpu.vector_store %arg10[%c0_54, %c0_55], %46 {strides = array<i32>} : memref<1x8xf32, #tpu.memory_space<vmem>>, vector<1x8xf32>,
    %c64_i32 = arith.constant 64 : i32
    %48 = arith.muli %arg0, %c64_i32 : i32
    %49 = tpu.assume_multiple %48, 64 : i32
    %50 = arith.index_cast %49 : i32 to index
    %c0_56 = arith.constant 0 : index
    %51 = vector.load %arg8[%50, %c0_56] : memref<128x8xf32, #tpu.memory_space<vmem>>, vector<64x8xf32>
    tpu.vector_store %arg8[%50, %c0_56], %36 {strides = array<i32>} : memref<128x8xf32, #tpu.memory_space<vmem>>, vector<64x8xf32>,
    %c1_i32 = arith.constant 1 : i32
    %52 = arith.cmpi eq, %arg0, %c1_i32 : i32
    %53 = arith.extui %52 : i1 to i32
    %c0_i32_57 = arith.constant 0 : i32
    %54 = arith.cmpi ne, %53, %c0_i32_57 : i32
    scf.if %54 {
      %c0_58 = arith.constant 0 : index
      %c0_59 = arith.constant 0 : index
      %55 = vector.load %arg9[%c0_58, %c0_59] : memref<1x8xf32, #tpu.memory_space<vmem>>, vector<1x8xf32>
      %cst_60 = arith.constant 7.812500e-03 : f32
      %56 = vector.broadcast %cst_60 : f32 to vector<1x8xf32>
      %57 = arith.mulf %55, %56 : vector<1x8xf32>
      %c0_61 = arith.constant 0 : index
      %c0_62 = arith.constant 0 : index
      %58 = vector.load %arg10[%c0_61, %c0_62] : memref<1x8xf32, #tpu.memory_space<vmem>>, vector<1x8xf32>
      %cst_63 = arith.constant 7.812500e-03 : f32
      %59 = vector.broadcast %cst_63 : f32 to vector<1x8xf32>
      %60 = arith.mulf %58, %59 : vector<1x8xf32>
      %61 = arith.mulf %57, %57 : vector<1x8xf32>
      %62 = arith.subf %60, %61 : vector<1x8xf32>
      %c0_64 = arith.constant 0 : index
      %c0_65 = arith.constant 0 : index
      %63 = vector.load %arg3[%c0_64, %c0_65] : memref<1x8xf32, #tpu.memory_space<vmem>>, vector<1x8xf32>
      %cst_66 = arith.constant 9.99999974E-6 : f32
      %64 = vector.broadcast %cst_66 : f32 to vector<1x8xf32>
      %65 = arith.addf %62, %64 : vector<1x8xf32>
      %66 = math.rsqrt %65 : vector<1x8xf32>
      %67 = arith.mulf %63, %66 : vector<1x8xf32>
      %c0_67 = arith.constant 0 : index
      %c0_68 = arith.constant 0 : index
      %68 = vector.load %arg4[%c0_67, %c0_68] : memref<1x8xf32, #tpu.memory_space<vmem>>, vector<1x8xf32>
      %69 = arith.mulf %57, %67 : vector<1x8xf32>
      %70 = arith.subf %68, %69 : vector<1x8xf32>
      %c0_69 = arith.constant 0 : index
      %c0_70 = arith.constant 0 : index
      %71 = vector.load %arg8[%c0_69, %c0_70] : memref<128x8xf32, #tpu.memory_space<vmem>>, vector<128x8xf32>
      %72 = vector.broadcast %67 : vector<1x8xf32> to vector<128x8xf32>
      %73 = arith.mulf %71, %72 : vector<128x8xf32>
      %74 = vector.broadcast %70 : vector<1x8xf32> to vector<128x8xf32>
      %75 = arith.addf %73, %74 : vector<128x8xf32>
      %cst_71 = arith.constant 0.000000e+00 : f32
      %76 = vector.broadcast %cst_71 : f32 to vector<128x8xf32>
      %77 = arith.maximumf %75, %76 : vector<128x8xf32>
      %78 = vector.shape_cast %77 : vector<128x8xf32> to vector<2x8x8x8xf32>
      %c0_72 = arith.constant 0 : index
      %c0_73 = arith.constant 0 : index
      %c0_74 = arith.constant 0 : index
      %c0_75 = arith.constant 0 : index
      %79 = vector.load %arg5[%c0_72, %c0_73, %c0_74, %c0_75] : memref<2x8x8x8xf32, #tpu.memory_space<vmem>>, vector<2x8x8x8xf32>
      tpu.vector_store %arg5[%c0_72, %c0_73, %c0_74, %c0_75], %78 {strides = array<i32>} : memref<2x8x8x8xf32, #tpu.memory_space<vmem>>, vector<2x8x8x8xf32>,
    } else {
    }
    return
  }
  func.func @transform_0(%arg0: i32) -> (i32, i32, i32, i32) {
    %c0_i32 = arith.constant 0 : i32
    %c0_i32_0 = arith.constant 0 : i32
    %c0_i32_1 = arith.constant 0 : i32
    %c0_i32_2 = arith.constant 0 : i32
    return %arg0, %c0_i32, %c0_i32_0, %c0_i32_1 : i32, i32, i32, i32
  }
  func.func @transform_1(%arg0: i32) -> (i32, i32) {
    %c0_i32 = arith.constant 0 : i32
    %c0_i32_0 = arith.constant 0 : i32
    %c0_i32_1 = arith.constant 0 : i32
    return %c0_i32, %c0_i32_0 : i32, i32
  }
  func.func @transform_2(%arg0: i32) -> (i32, i32) {
    %c0_i32 = arith.constant 0 : i32
    %c0_i32_0 = arith.constant 0 : i32
    %c0_i32_1 = arith.constant 0 : i32
    return %c0_i32, %c0_i32_0 : i32, i32
  }
  func.func @transform_3(%arg0: i32) -> (i32, i32) {
    %c0_i32 = arith.constant 0 : i32
    %c0_i32_0 = arith.constant 0 : i32
    %c0_i32_1 = arith.constant 0 : i32
    return %c0_i32, %c0_i32_0 : i32, i32
  }
  func.func @transform_4(%arg0: i32) -> (i32, i32, i32, i32) {
    %c0_i32 = arith.constant 0 : i32
    %c0_i32_0 = arith.constant 0 : i32
    %c0_i32_1 = arith.constant 0 : i32
    %c0_i32_2 = arith.constant 0 : i32
    %c0_i32_3 = arith.constant 0 : i32
    return %c0_i32, %c0_i32_0, %c0_i32_1, %c0_i32_2 : i32, i32, i32, i32
  }
}

</mosaic_0001>

<llo_original>
// kernel: encode_down.2
$region0: #{encode_down.2}
  #allocation0 [shape = 'u32[]', space=smem, size = 0x4, offset = 0x4, fixed_abs, tag = 'smem constant byte address 0x4 - core index']
  #allocation1 [shape = 'u32[144,128]{1,0:T(1,128)}', space=vmem, size = 0x12000, scoped, tag = 'internal scratch']
  #allocation2 [shape = 'f32[10,10,4]{2,1,0:T(8,128)}', space=vmem, size = 0x14000, scoped, tag = 'scratch operand']
  #allocation3 [shape = 'f32[64,36]{1,0:T(8,128)}', space=vmem, size = 0x8000, scoped, tag = 'scratch operand']
  #allocation4 [shape = 'f32[128,8]{1,0:T(8,128)}', space=vmem, size = 0x10000, scoped, tag = 'scratch operand']
  #allocation5 [shape = 'f32[1,8]{1,0:T(1,128)}', space=vmem, size = 0x200, scoped, tag = 'scratch operand']
  #allocation6 [shape = 'f32[1,8]{1,0:T(1,128)}', space=vmem, size = 0x200, scoped, tag = 'scratch operand']
  %s0 = inlined_call_operand.vmem [shape: f32[2,16,16,4], index: 0, kind: input, shape index: {}]
  %s1 = inlined_call_operand.vmem [shape: bf16[36,8], index: 1, kind: input, shape index: {}]
  %s2 = inlined_call_operand.vmem [shape: f32[1,8], index: 2, kind: input, shape index: {}]
  %s3 = inlined_call_operand.vmem [shape: f32[1,8], index: 3, kind: input, shape index: {}]
  %s4 = inlined_call_operand.vmem [shape: f32[2,8,8,8], index: 4, kind: output, shape index: {}]
  %s5 = sld [smem:[#allocation0]]
  $region57: #{encode_down.2} parent=0
    _
  %s7 = ssub.s32 1, %s5
  %s8 = scalar_select 0, %s7, %s5
  loop: start=0, step=1, limit=4
  $region2: #{encode_down.2} parent=0 // loop_pre_header
    _
  $region3: #{encode_down.2} parent=0 // loop_header
    %s10 = sphi 0, %s14
    %p11 = scmp.ge.s32.totalorder %s10, 4
    %s20 = sphi 0, %s22
    %s23 = sphi 0, %s20
    %s24 = sphi 0, %s23
    %s40 = sphi 0, %s24
    %s44 = sphi 0, %s44
    %s46 = sphi 0, %s44
    %s47 = sphi 0, %s46
    %s61 = sphi 0, %s47
    %s65 = sphi 0, %s65
    %s67 = sphi 0, %s65
    %s68 = sphi 0, %s67
    %s82 = sphi 0, %s68
    %s86 = sphi 0, %s86
    %s88 = sphi 0, %s86
    %s89 = sphi 0, %s88
    %s103 = sphi 0, %s89
    %s107 = sphi 0, %s107
    %s109 = sphi 0, %s107
    %s110 = sphi 0, %s109
    %s124 = sphi 0, %s110
  $region4: #{encode_down.2} parent=0 // loop_header_branch
    %13 = sbr.rel (%p11) target = $region8
  $region5: #{encode_down.2} parent=0 // loop_body
    %s15 = ssub.s32 %s10, 1
    %s16 = ssub.s32 %s10, 2
    %s17 = sadd.s32 %s10, 1
    %s18 = ssub.s32 %s10, %s17
    %p19 = scmp.eq.s32.totalorder %s18, 0
    %s21 = sadd.s32 %s20, 1
    %s22 = scalar_select %p19, %s20, %s21
    %p25 = pneg %p19
    %p26 = scmp.eq.s32.totalorder %s10, 1
    %p27 = por %p25, %p26
    %p28 = scmp.ne.s32.totalorder %s20, %s23
    %p29 = scmp.eq.s32.totalorder %s10, 0
    %p30 = por %p28, %p29
    %p31 = scmp.ne.s32.totalorder %s20, %s23
    %p32 = scmp.eq.s32.totalorder %s15, 1
    %p33 = por %p31, %p32
    %p34 = scmp.ne.s32.totalorder %s23, %s24
    %p35 = scmp.eq.s32.totalorder %s15, 0
    %p36 = por %p34, %p35
    %p37 = scmp.ne.s32.totalorder %s23, %s24
    %p38 = scmp.eq.s32.totalorder %s16, 1
    %p39 = por %p37, %p38
    %p41 = scmp.ne.s32.totalorder %s24, %s40
    %p42 = scmp.eq.s32.totalorder %s16, 0
    %p43 = por %p41, %p42
    %s45 = sadd.s32 %s44, 1
    %p48 = scmp.eq.s32.totalorder %s10, 1
    %p49 = scmp.ne.s32.totalorder %s44, %s46
    %p50 = scmp.eq.s32.totalorder %s10, 0
    %p51 = por %p49, %p50
    %p52 = scmp.ne.s32.totalorder %s44, %s46
    %p53 = scmp.eq.s32.totalorder %s15, 1
    %p54 = por %p52, %p53
    %p55 = scmp.ne.s32.totalorder %s46, %s47
    %p56 = scmp.eq.s32.totalorder %s15, 0
    %p57 = por %p55, %p56
    %p58 = scmp.ne.s32.totalorder %s46, %s47
    %p59 = scmp.eq.s32.totalorder %s16, 1
    %p60 = por %p58, %p59
    %p62 = scmp.ne.s32.totalorder %s47, %s61
    %p63 = scmp.eq.s32.totalorder %s16, 0
    %p64 = por %p62, %p63
    %s66 = sadd.s32 %s65, 1
    %p69 = scmp.eq.s32.totalorder %s10, 1
    %p70 = scmp.ne.s32.totalorder %s65, %s67
    %p71 = scmp.eq.s32.totalorder %s10, 0
    %p72 = por %p70, %p71
    %p73 = scmp.ne.s32.totalorder %s65, %s67
    %p74 = scmp.eq.s32.totalorder %s15, 1
    %p75 = por %p73, %p74
    %p76 = scmp.ne.s32.totalorder %s67, %s68
    %p77 = scmp.eq.s32.totalorder %s15, 0
    %p78 = por %p76, %p77
    %p79 = scmp.ne.s32.totalorder %s67, %s68
    %p80 = scmp.eq.s32.totalorder %s16, 1
    %p81 = por %p79, %p80
    %p83 = scmp.ne.s32.totalorder %s68, %s82
    %p84 = scmp.eq.s32.totalorder %s16, 0
    %p85 = por %p83, %p84
    %s87 = sadd.s32 %s86, 1
    %p90 = scmp.eq.s32.totalorder %s10, 1
    %p91 = scmp.ne.s32.totalorder %s86, %s88
    %p92 = scmp.eq.s32.totalorder %s10, 0
    %p93 = por %p91, %p92
    %p94 = scmp.ne.s32.totalorder %s86, %s88
    %p95 = scmp.eq.s32.totalorder %s15, 1
    %p96 = por %p94, %p95
    %p97 = scmp.ne.s32.totalorder %s88, %s89
    %p98 = scmp.eq.s32.totalorder %s15, 0
    %p99 = por %p97, %p98
    %p100 = scmp.ne.s32.totalorder %s88, %s89
    %p101 = scmp.eq.s32.totalorder %s16, 1
    %p102 = por %p100, %p101
    %p104 = scmp.ne.s32.totalorder %s89, %s103
    %p105 = scmp.eq.s32.totalorder %s16, 0
    %p106 = por %p104, %p105
    %s108 = sadd.s32 %s107, 1
    %p111 = scmp.eq.s32.totalorder %s10, 1
    %p112 = scmp.ne.s32.totalorder %s107, %s109
    %p113 = scmp.eq.s32.totalorder %s10, 0
    %p114 = por %p112, %p113
    %p115 = scmp.ne.s32.totalorder %s107, %s109
    %p116 = scmp.eq.s32.totalorder %s15, 1
    %p117 = por %p115, %p116
    %p118 = scmp.ne.s32.totalorder %s109, %s110
    %p119 = scmp.eq.s32.totalorder %s15, 0
    %p120 = por %p118, %p119
    %p121 = scmp.ne.s32.totalorder %s109, %s110
    %p122 = scmp.eq.s32.totalorder %s16, 1
    %p123 = por %p121, %p122
    %p125 = scmp.ne.s32.totalorder %s110, %s124
    %p126 = scmp.eq.s32.totalorder %s16, 0
    %p127 = por %p125, %p126
    %p128 = scmp.le.s32.totalorder 1, %s10
    %p129 = scmp.lt.s32.totalorder %s10, 3
    %p130 = pnand %p128, %p129
    %p131 = pneg %p130
    // Predicated region
    $region9: #{encode_down.2} parent=5 // pred_check
      _
    $region10: #{encode_down.2} parent=5 // pred_check_branch
      %133 = sbr.rel (%p130) target = $region12
    $region11: #{encode_down.2} parent=5 // pred_region
      %s134 = ssub.s32 %s10, 1
      // Predicated region
      $region13: #{encode_down.2} parent=11 // pred_check
        %p135 = pneg %p57
      $region14: #{encode_down.2} parent=11 // pred_check_branch
        %137 = sbr.rel (%p135) target = $region16
      $region15: #{encode_down.2} parent=11 // pred_region
        _
      $region16: #{encode_down.2} parent=11 // pred_fallthru
        _
      // Predicated region
      $region17: #{encode_down.2} parent=11 // pred_check
        %p138 = pneg %p78
      $region18: #{encode_down.2} parent=11 // pred_check_branch
        %140 = sbr.rel (%p138) target = $region20
      $region19: #{encode_down.2} parent=11 // pred_region
        _
      $region20: #{encode_down.2} parent=11 // pred_fallthru
        _
      // Predicated region
      $region21: #{encode_down.2} parent=11 // pred_check
        %p141 = pneg %p99
      $region22: #{encode_down.2} parent=11 // pred_check_branch
        %143 = sbr.rel (%p141) target = $region24
      $region23: #{encode_down.2} parent=11 // pred_region
        _
      $region24: #{encode_down.2} parent=11 // pred_fallthru
        _
    $region12: #{encode_down.2} parent=5 // pred_fallthru
      _
    %p144 = scmp.lt.s32.totalorder %s10, 2
    // Predicated region
    $region25: #{encode_down.2} parent=5 // pred_check
      %p145 = pneg %p144
    $region26: #{encode_down.2} parent=5 // pred_check_branch
      %147 = sbr.rel (%p145) target = $region28
    $region27: #{encode_down.2} parent=5 // pred_region
      // Predicated region
      $region29: #{encode_down.2} parent=27 // pred_check
        %p148 = pneg %p30
      $region30: #{encode_down.2} parent=27 // pred_check_branch
        %150 = sbr.rel (%p148) target = $region32
      $region31: #{encode_down.2} parent=27 // pred_region
        %p151 = scmp.lt.s32.totalorder %s10, 1
        %s152 = scalar_select %p151, %s10, 1
        %s153 = smul.addr %s152, 32
        %s154 = smul.addr %s153, 8
        %s155 = scalar_lea.vmem %s0, %s154
      $region32: #{encode_down.2} parent=27 // pred_fallthru
        _
    $region28: #{encode_down.2} parent=5 // pred_fallthru
      _
    %p156 = scmp.le.s32.totalorder 1, %s10
    %p157 = scmp.lt.s32.totalorder %s10, 3
    %p158 = pnand %p156, %p157
    %p159 = pneg %p158
    // Predicated region
    $region33: #{encode_down.2} parent=5 // pred_check
      _
    $region34: #{encode_down.2} parent=5 // pred_check_branch
      %161 = sbr.rel (%p158) target = $region36
    $region35: #{encode_down.2} parent=5 // pred_region
      %s162 = ssub.s32 %s10, 1
      %p163 = scmp.lt.s32.totalorder %s15, 1
      %s164 = scalar_select %p163, %s15, 1
      %s165 = smul.addr %s164, 32
      %s166 = smul.addr %s165, 8
      %s167 = scalar_lea.vmem %s0, %s166
      %p168 = pneg %p36
      %p169 = pneg %p33
      %p170 = pneg %p57
      %p171 = pneg %p54
      %p172 = pneg %p78
      %p173 = pneg %p75
      %p174 = pneg %p99
      %p175 = pneg %p96
      %p176 = pneg %p120
      %p177 = pneg %p117
      %p178 = scmp.lt.s32.totalorder %s15, 1
      %s179 = scalar_select %p178, %s15, 1
      %s180 = smul.addr %s179, 32
      %s181 = smul.addr %s180, 8
      %s182 = scalar_lea.vmem %s0, %s181
      %p184 = scmp.eq.s32.totalorder %s15, 0
      // Predicated region
      $region37: #{encode_down.2} parent=35 // pred_check
        %p185 = pneg %p184
      $region38: #{encode_down.2} parent=35 // pred_check_branch
        %187 = sbr.rel (%p185) target = $region40
      $region39: #{encode_down.2} parent=35 // pred_region
        %vm188 = vcmask 31744
        %189 = vst.msk [vmem:[#allocation2] sm:$0xff] %vm188, 0.0
        %vm190 = vcmask 25600
        %191 = vst.msk [vmem:[#allocation2 + $0x8] sm:$0x3] %vm190, 0.0
        %192 = vst.msk [vmem:[#allocation2 + $0x10] sm:$0xff] %vm188, 0.0
        %193 = vst.msk [vmem:[#allocation2 + $0x18] sm:$0x3] %vm190, 0.0
        %194 = vst.msk [vmem:[#allocation2 + $0x20] sm:$0xff] %vm188, 0.0
        %195 = vst.msk [vmem:[#allocation2 + $0x28] sm:$0x3] %vm190, 0.0
        %196 = vst.msk [vmem:[#allocation2 + $0x30] sm:$0xff] %vm188, 0.0
        %197 = vst.msk [vmem:[#allocation2 + $0x38] sm:$0x3] %vm190, 0.0
        %198 = vst.msk [vmem:[#allocation2 + $0x40] sm:$0xff] %vm188, 0.0
        %199 = vst.msk [vmem:[#allocation2 + $0x48] sm:$0x3] %vm190, 0.0
        %200 = vst.msk [vmem:[#allocation2 + $0x50] sm:$0xff] %vm188, 0.0
        %201 = vst.msk [vmem:[#allocation2 + $0x58] sm:$0x3] %vm190, 0.0
        %202 = vst.msk [vmem:[#allocation2 + $0x60] sm:$0xff] %vm188, 0.0
        %203 = vst.msk [vmem:[#allocation2 + $0x68] sm:$0x3] %vm190, 0.0
        %204 = vst.msk [vmem:[#allocation2 + $0x70] sm:$0xff] %vm188, 0.0
        %205 = vst.msk [vmem:[#allocation2 + $0x78] sm:$0x3] %vm190, 0.0
        %206 = vst.msk [vmem:[#allocation2 + $0x80] sm:$0xff] %vm188, 0.0
        %207 = vst.msk [vmem:[#allocation2 + $0x88] sm:$0x3] %vm190, 0.0
        %208 = vst.msk [vmem:[#allocation2 + $0x90] sm:$0xff] %vm188, 0.0
        %209 = vst.msk [vmem:[#allocation2 + $0x98] sm:$0x3] %vm190, 0.0
        %vm210 = vcmask 57344
        %211 = vst.msk [vmem:[#allocation5] sm:$0x1] %vm210, 0.0
        %212 = vst.msk [vmem:[#allocation6] sm:$0x1] %vm210, 0.0
      $region40: #{encode_down.2} parent=35 // pred_fallthru
        _
      %v213 = vld [vmem:[%s182] ss:$2 sm:$0xff]
      %s214 = scalar_lea.vmem %s182, 32
      %v215 = vld [vmem:[%s214] ss:$2 sm:$0xff]
      %s216 = scalar_lea.vmem %s182, 64
      %v217 = vld [vmem:[%s216] ss:$2 sm:$0xff]
      %s218 = scalar_lea.vmem %s182, 96
      %v219 = vld [vmem:[%s218] ss:$2 sm:$0xff]
      %s220 = scalar_lea.vmem %s182, 128
      %v221 = vld [vmem:[%s220] ss:$2 sm:$0xff]
      %s222 = scalar_lea.vmem %s182, 160
      %v223 = vld [vmem:[%s222] ss:$2 sm:$0xff]
      %s224 = scalar_lea.vmem %s182, 192
      %v225 = vld [vmem:[%s224] ss:$2 sm:$0xff]
      %s226 = scalar_lea.vmem %s182, 224
      %v227 = vld [vmem:[%s226] ss:$2 sm:$0xff]
      %s228 = scalar_lea.vmem %s182, 1
      %v229 = vld [vmem:[%s228] ss:$2 sm:$0xff]
      %s230 = scalar_lea.vmem %s182, 33
      %v231 = vld [vmem:[%s230] ss:$2 sm:$0xff]
      %s232 = scalar_lea.vmem %s182, 65
      %v233 = vld [vmem:[%s232] ss:$2 sm:$0xff]
      %s234 = scalar_lea.vmem %s182, 97
      %v235 = vld [vmem:[%s234] ss:$2 sm:$0xff]
      %s236 = scalar_lea.vmem %s182, 129
      %v237 = vld [vmem:[%s236] ss:$2 sm:$0xff]
      %s238 = scalar_lea.vmem %s182, 161
      %v239 = vld [vmem:[%s238] ss:$2 sm:$0xff]
      %s240 = scalar_lea.vmem %s182, 193
      %v241 = vld [vmem:[%s240] ss:$2 sm:$0xff]
      %s242 = scalar_lea.vmem %s182, 225
      %v243 = vld [vmem:[%s242] ss:$2 sm:$0xff]
      %s244 = scalar_lea.vmem %s182, 16
      %v245 = vld [vmem:[%s244] ss:$2 sm:$0xff]
      %s246 = scalar_lea.vmem %s244, 32
      %v247 = vld [vmem:[%s246] ss:$2 sm:$0xff]
      %s248 = scalar_lea.vmem %s244, 64
      %v249 = vld [vmem:[%s248] ss:$2 sm:$0xff]
      %s250 = scalar_lea.vmem %s244, 96
      %v251 = vld [vmem:[%s250] ss:$2 sm:$0xff]
      %s252 = scalar_lea.vmem %s244, 128
      %v253 = vld [vmem:[%s252] ss:$2 sm:$0xff]
      %s254 = scalar_lea.vmem %s244, 160
      %v255 = vld [vmem:[%s254] ss:$2 sm:$0xff]
      %s256 = scalar_lea.vmem %s244, 192
      %v257 = vld [vmem:[%s256] ss:$2 sm:$0xff]
      %s258 = scalar_lea.vmem %s244, 224
      %v259 = vld [vmem:[%s258] ss:$2 sm:$0xff]
      %s260 = scalar_lea.vmem %s244, 1
      %v261 = vld [vmem:[%s260] ss:$2 sm:$0xff]
      %s262 = scalar_lea.vmem %s244, 33
      %v263 = vld [vmem:[%s262] ss:$2 sm:$0xff]
      %s264 = scalar_lea.vmem %s244, 65
      %v265 = vld [vmem:[%s264] ss:$2 sm:$0xff]
      %s266 = scalar_lea.vmem %s244, 97
      %v267 = vld [vmem:[%s266] ss:$2 sm:$0xff]
      %s268 = scalar_lea.vmem %s244, 129
      %v269 = vld [vmem:[%s268] ss:$2 sm:$0xff]
      %s270 = scalar_lea.vmem %s244, 161
      %v271 = vld [vmem:[%s270] ss:$2 sm:$0xff]
      %s272 = scalar_lea.vmem %s244, 193
      %v273 = vld [vmem:[%s272] ss:$2 sm:$0xff]
      %s274 = scalar_lea.vmem %s244, 225
      %v275 = vld [vmem:[%s274] ss:$2 sm:$0xff]
      %v276 = vmax.f32 %v213, %v229
      %v277 = vmax.f32 %v215, %v231
      %v278 = vmax.f32 %v217, %v233
      %v279 = vmax.f32 %v219, %v235
      %v280 = vmax.f32 %v221, %v237
      %v281 = vmax.f32 %v223, %v239
      %v282 = vmax.f32 %v225, %v241
      %v283 = vmax.f32 %v227, %v243
      %v284 = vmax.f32 %v245, %v261
      %v285 = vmax.f32 %v247, %v263
      %v286 = vmax.f32 %v249, %v265
      %v287 = vmax.f32 %v251, %v267
      %v288 = vmax.f32 %v253, %v269
      %v289 = vmax.f32 %v255, %v271
      %v290 = vmax.f32 %v257, %v273
      %v291 = vmax.f32 %v259, %v275
      %v292 = vmax.f32 %v276, %v284
      %v293 = vmax.f32 %v277, %v285
      %v294 = vmax.f32 %v278, %v286
      %v295 = vmax.f32 %v279, %v287
      %v296 = vmax.f32 %v280, %v288
      %v297 = vmax.f32 %v281, %v289
      %v298 = vmax.f32 %v282, %v290
      %v299 = vmax.f32 %v283, %v291
      %s300 = scalar_lea.vmem [#allocation2], 16
      %vm301 = vcmask 31744
      %302 = vst.msk [vmem:[%s300 + $0x1] sm:$0xff] %vm301, %v292
      %303 = vst.msk [vmem:[%s300 + $0x11] sm:$0xff] %vm301, %v293
      %304 = vst.msk [vmem:[%s300 + $0x21] sm:$0xff] %vm301, %v294
      %305 = vst.msk [vmem:[%s300 + $0x31] sm:$0xff] %vm301, %v295
      %306 = vst.msk [vmem:[%s300 + $0x41] sm:$0xff] %vm301, %v296
      %307 = vst.msk [vmem:[%s300 + $0x51] sm:$0xff] %vm301, %v297
      %308 = vst.msk [vmem:[%s300 + $0x61] sm:$0xff] %vm301, %v298
      %309 = vst.msk [vmem:[%s300 + $0x71] sm:$0xff] %vm301, %v299
      %v310 = vld [vmem:[#allocation2] sm:$0xff]
      %v311 = vld [vmem:[#allocation2 + $0x10] sm:$0xff]
      %v312 = vld [vmem:[#allocation2 + $0x20] sm:$0xff]
      %v313 = vld [vmem:[#allocation2 + $0x30] sm:$0xff]
      %v314 = vld [vmem:[#allocation2 + $0x40] sm:$0xff]
      %v315 = vld [vmem:[#allocation2 + $0x50] sm:$0xff]
      %v316 = vld [vmem:[#allocation2 + $0x60] sm:$0xff]
      %v317 = vld [vmem:[#allocation2 + $0x70] sm:$0xff]
      %318 = vst.msk [vmem:[#allocation3] sm:$0xff] %vm301, %v310
      %319 = vst.msk [vmem:[#allocation3 + $0x8] sm:$0xff] %vm301, %v311
      %320 = vst.msk [vmem:[#allocation3 + $0x10] sm:$0xff] %vm301, %v312
      %321 = vst.msk [vmem:[#allocation3 + $0x18] sm:$0xff] %vm301, %v313
      %322 = vst.msk [vmem:[#allocation3 + $0x20] sm:$0xff] %vm301, %v314
      %323 = vst.msk [vmem:[#allocation3 + $0x28] sm:$0xff] %vm301, %v315
      %324 = vst.msk [vmem:[#allocation3 + $0x30] sm:$0xff] %vm301, %v316
      %325 = vst.msk [vmem:[#allocation3 + $0x38] sm:$0xff] %vm301, %v317
      %v326 = vld [vmem:[#allocation2 + $0x1] sm:$0xff]
      %v327 = vld [vmem:[#allocation2 + $0x11] sm:$0xff]
      %v328 = vld [vmem:[#allocation2 + $0x21] sm:$0xff]
      %v329 = vld [vmem:[#allocation2 + $0x31] sm:$0xff]
      %v330 = vld [vmem:[#allocation2 + $0x41] sm:$0xff]
      %v331 = vld [vmem:[#allocation2 + $0x51] sm:$0xff]
      %v332 = vld [vmem:[#allocation2 + $0x61] sm:$0xff]
      %v333 = vld [vmem:[#allocation2 + $0x71] sm:$0xff]
      %342 = vrot.lane.b32.xlu0 %v326, 4
      %v343 = vpop.permute.xlu0 %342
      %344 = vrot.lane.b32.xlu0 %v327, 4
      %v345 = vpop.permute.xlu0 %344
      %346 = vrot.lane.b32.xlu0 %v328, 4
      %v347 = vpop.permute.xlu0 %346
      %348 = vrot.lane.b32.xlu0 %v329, 4
      %v349 = vpop.permute.xlu0 %348
      %350 = vrot.lane.b32.xlu0 %v330, 4
      %v351 = vpop.permute.xlu0 %350
      %352 = vrot.lane.b32.xlu0 %v331, 4
      %v353 = vpop.permute.xlu0 %352
      %354 = vrot.lane.b32.xlu0 %v332, 4
      %v355 = vpop.permute.xlu0 %354
      %356 = vrot.lane.b32.xlu0 %v333, 4
      %v357 = vpop.permute.xlu0 %356
      %vm366 = vcmask 64544
      %367 = vst.msk [vmem:[#allocation3] sm:$0xff] %vm366, %v343
      %368 = vst.msk [vmem:[#allocation3 + $0x8] sm:$0xff] %vm366, %v345
      %369 = vst.msk [vmem:[#allocation3 + $0x10] sm:$0xff] %vm366, %v347
      %370 = vst.msk [vmem:[#allocation3 + $0x18] sm:$0xff] %vm366, %v349
      %371 = vst.msk [vmem:[#allocation3 + $0x20] sm:$0xff] %vm366, %v351
      %372 = vst.msk [vmem:[#allocation3 + $0x28] sm:$0xff] %vm366, %v353
      %373 = vst.msk [vmem:[#allocation3 + $0x30] sm:$0xff] %vm366, %v355
      %374 = vst.msk [vmem:[#allocation3 + $0x38] sm:$0xff] %vm366, %v357
      %v375 = vld [vmem:[#allocation2 + $0x2] sm:$0xff]
      %v376 = vld [vmem:[#allocation2 + $0x12] sm:$0xff]
      %v377 = vld [vmem:[#allocation2 + $0x22] sm:$0xff]
      %v378 = vld [vmem:[#allocation2 + $0x32] sm:$0xff]
      %v379 = vld [vmem:[#allocation2 + $0x42] sm:$0xff]
      %v380 = vld [vmem:[#allocation2 + $0x52] sm:$0xff]
      %v381 = vld [vmem:[#allocation2 + $0x62] sm:$0xff]
      %v382 = vld [vmem:[#allocation2 + $0x72] sm:$0xff]
      %391 = vrot.lane.b32.xlu0 %v375, 8
      %v392 = vpop.permute.xlu0 %391
      %393 = vrot.lane.b32.xlu0 %v376, 8
      %v394 = vpop.permute.xlu0 %393
      %395 = vrot.lane.b32.xlu0 %v377, 8
      %v396 = vpop.permute.xlu0 %395
      %397 = vrot.lane.b32.xlu0 %v378, 8
      %v398 = vpop.permute.xlu0 %397
      %399 = vrot.lane.b32.xlu0 %v379, 8
      %v400 = vpop.permute.xlu0 %399
      %401 = vrot.lane.b32.xlu0 %v380, 8
      %v402 = vpop.permute.xlu0 %401
      %403 = vrot.lane.b32.xlu0 %v381, 8
      %v404 = vpop.permute.xlu0 %403
      %405 = vrot.lane.b32.xlu0 %v382, 8
      %v406 = vpop.permute.xlu0 %405
      %vm415 = vcmask 97344
      %416 = vst.msk [vmem:[#allocation3] sm:$0xff] %vm415, %v392
      %417 = vst.msk [vmem:[#allocation3 + $0x8] sm:$0xff] %vm415, %v394
      %418 = vst.msk [vmem:[#allocation3 + $0x10] sm:$0xff] %vm415, %v396
      %419 = vst.msk [vmem:[#allocation3 + $0x18] sm:$0xff] %vm415, %v398
      %420 = vst.msk [vmem:[#allocation3 + $0x20] sm:$0xff] %vm415, %v400
      %421 = vst.msk [vmem:[#allocation3 + $0x28] sm:$0xff] %vm415, %v402
      %422 = vst.msk [vmem:[#allocation3 + $0x30] sm:$0xff] %vm415, %v404
      %423 = vst.msk [vmem:[#allocation3 + $0x38] sm:$0xff] %vm415, %v406
      %v424 = vld [vmem:[%s300] sm:$0xff]
      %v425 = vld [vmem:[%s300 + $0x10] sm:$0xff]
      %v426 = vld [vmem:[%s300 + $0x20] sm:$0xff]
      %v427 = vld [vmem:[%s300 + $0x30] sm:$0xff]
      %v428 = vld [vmem:[%s300 + $0x40] sm:$0xff]
      %v429 = vld [vmem:[%s300 + $0x50] sm:$0xff]
      %v430 = vld [vmem:[%s300 + $0x60] sm:$0xff]
      %v431 = vld [vmem:[%s300 + $0x70] sm:$0xff]
      %440 = vrot.lane.b32.xlu0 %v424, 12
      %v441 = vpop.permute.xlu0 %440
      %442 = vrot.lane.b32.xlu0 %v425, 12
      %v443 = vpop.permute.xlu0 %442
      %444 = vrot.lane.b32.xlu0 %v426, 12
      %v445 = vpop.permute.xlu0 %444
      %446 = vrot.lane.b32.xlu0 %v427, 12
      %v447 = vpop.permute.xlu0 %446
      %448 = vrot.lane.b32.xlu0 %v428, 12
      %v449 = vpop.permute.xlu0 %448
      %450 = vrot.lane.b32.xlu0 %v429, 12
      %v451 = vpop.permute.xlu0 %450
      %452 = vrot.lane.b32.xlu0 %v430, 12
      %v453 = vpop.permute.xlu0 %452
      %454 = vrot.lane.b32.xlu0 %v431, 12
      %v455 = vpop.permute.xlu0 %454
      %vm464 = vcmask 130144
      %465 = vst.msk [vmem:[#allocation3] sm:$0xff] %vm464, %v441
      %466 = vst.msk [vmem:[#allocation3 + $0x8] sm:$0xff] %vm464, %v443
      %467 = vst.msk [vmem:[#allocation3 + $0x10] sm:$0xff] %vm464, %v445
      %468 = vst.msk [vmem:[#allocation3 + $0x18] sm:$0xff] %vm464, %v447
      %469 = vst.msk [vmem:[#allocation3 + $0x20] sm:$0xff] %vm464, %v449
      %470 = vst.msk [vmem:[#allocation3 + $0x28] sm:$0xff] %vm464, %v451
      %471 = vst.msk [vmem:[#allocation3 + $0x30] sm:$0xff] %vm464, %v453
      %472 = vst.msk [vmem:[#allocation3 + $0x38] sm:$0xff] %vm464, %v455
      %v473 = vld [vmem:[%s300 + $0x1] sm:$0xff]
      %v474 = vld [vmem:[%s300 + $0x11] sm:$0xff]
      %v475 = vld [vmem:[%s300 + $0x21] sm:$0xff]
      %v476 = vld [vmem:[%s300 + $0x31] sm:$0xff]
      %v477 = vld [vmem:[%s300 + $0x41] sm:$0xff]
      %v478 = vld [vmem:[%s300 + $0x51] sm:$0xff]
      %v479 = vld [vmem:[%s300 + $0x61] sm:$0xff]
      %v480 = vld [vmem:[%s300 + $0x71] sm:$0xff]
      %489 = vrot.lane.b32.xlu0 %v473, 16
      %v490 = vpop.permute.xlu0 %489
      %491 = vrot.lane.b32.xlu0 %v474, 16
      %v492 = vpop.permute.xlu0 %491
      %493 = vrot.lane.b32.xlu0 %v475, 16
      %v494 = vpop.permute.xlu0 %493
      %495 = vrot.lane.b32.xlu0 %v476, 16
      %v496 = vpop.permute.xlu0 %495
      %497 = vrot.lane.b32.xlu0 %v477, 16
      %v498 = vpop.permute.xlu0 %497
      %499 = vrot.lane.b32.xlu0 %v478, 16
      %v500 = vpop.permute.xlu0 %499
      %501 = vrot.lane.b32.xlu0 %v479, 16
      %v502 = vpop.permute.xlu0 %501
      %503 = vrot.lane.b32.xlu0 %v480, 16
      %v504 = vpop.permute.xlu0 %503
      %vm513 = vcmask 162944
      %514 = vst.msk [vmem:[#allocation3] sm:$0xff] %vm513, %v490
      %515 = vst.msk [vmem:[#allocation3 + $0x8] sm:$0xff] %vm513, %v492
      %516 = vst.msk [vmem:[#allocation3 + $0x10] sm:$0xff] %vm513, %v494
      %517 = vst.msk [vmem:[#allocation3 + $0x18] sm:$0xff] %vm513, %v496
      %518 = vst.msk [vmem:[#allocation3 + $0x20] sm:$0xff] %vm513, %v498
      %519 = vst.msk [vmem:[#allocation3 + $0x28] sm:$0xff] %vm513, %v500
      %520 = vst.msk [vmem:[#allocation3 + $0x30] sm:$0xff] %vm513, %v502
      %521 = vst.msk [vmem:[#allocation3 + $0x38] sm:$0xff] %vm513, %v504
      %v522 = vld [vmem:[%s300 + $0x2] sm:$0xff]
      %v523 = vld [vmem:[%s300 + $0x12] sm:$0xff]
      %v524 = vld [vmem:[%s300 + $0x22] sm:$0xff]
      %v525 = vld [vmem:[%s300 + $0x32] sm:$0xff]
      %v526 = vld [vmem:[%s300 + $0x42] sm:$0xff]
      %v527 = vld [vmem:[%s300 + $0x52] sm:$0xff]
      %v528 = vld [vmem:[%s300 + $0x62] sm:$0xff]
      %v529 = vld [vmem:[%s300 + $0x72] sm:$0xff]
      %538 = vrot.lane.b32.xlu0 %v522, 20
      %v539 = vpop.permute.xlu0 %538
      %540 = vrot.lane.b32.xlu0 %v523, 20
      %v541 = vpop.permute.xlu0 %540
      %542 = vrot.lane.b32.xlu0 %v524, 20
      %v543 = vpop.permute.xlu0 %542
      %544 = vrot.lane.b32.xlu0 %v525, 20
      %v545 = vpop.permute.xlu0 %544
      %546 = vrot.lane.b32.xlu0 %v526, 20
      %v547 = vpop.permute.xlu0 %546
      %548 = vrot.lane.b32.xlu0 %v527, 20
      %v549 = vpop.permute.xlu0 %548
      %550 = vrot.lane.b32.xlu0 %v528, 20
      %v551 = vpop.permute.xlu0 %550
      %552 = vrot.lane.b32.xlu0 %v529, 20
      %v553 = vpop.permute.xlu0 %552
      %vm562 = vcmask 195744
      %563 = vst.msk [vmem:[#allocation3] sm:$0xff] %vm562, %v539
      %564 = vst.msk [vmem:[#allocation3 + $0x8] sm:$0xff] %vm562, %v541
      %565 = vst.msk [vmem:[#allocation3 + $0x10] sm:$0xff] %vm562, %v543
      %566 = vst.msk [vmem:[#allocation3 + $0x18] sm:$0xff] %vm562, %v545
      %567 = vst.msk [vmem:[#allocation3 + $0x20] sm:$0xff] %vm562, %v547
      %568 = vst.msk [vmem:[#allocation3 + $0x28] sm:$0xff] %vm562, %v549
      %569 = vst.msk [vmem:[#allocation3 + $0x30] sm:$0xff] %vm562, %v551
      %570 = vst.msk [vmem:[#allocation3 + $0x38] sm:$0xff] %vm562, %v553
      %s571 = scalar_lea.vmem [#allocation2], 32
      %v572 = vld [vmem:[%s571] sm:$0xff]
      %v573 = vld [vmem:[%s571 + $0x10] sm:$0xff]
      %v574 = vld [vmem:[%s571 + $0x20] sm:$0xff]
      %v575 = vld [vmem:[%s571 + $0x30] sm:$0xff]
      %v576 = vld [vmem:[%s571 + $0x40] sm:$0xff]
      %v577 = vld [vmem:[%s571 + $0x50] sm:$0xff]
      %v578 = vld [vmem:[%s571 + $0x60] sm:$0xff]
      %v579 = vld [vmem:[%s571 + $0x70] sm:$0xff]
      %588 = vrot.lane.b32.xlu0 %v572, 24
      %v589 = vpop.permute.xlu0 %588
      %590 = vrot.lane.b32.xlu0 %v573, 24
      %v591 = vpop.permute.xlu0 %590
      %592 = vrot.lane.b32.xlu0 %v574, 24
      %v593 = vpop.permute.xlu0 %592
      %594 = vrot.lane.b32.xlu0 %v575, 24
      %v595 = vpop.permute.xlu0 %594
      %596 = vrot.lane.b32.xlu0 %v576, 24
      %v597 = vpop.permute.xlu0 %596
      %598 = vrot.lane.b32.xlu0 %v577, 24
      %v599 = vpop.permute.xlu0 %598
      %600 = vrot.lane.b32.xlu0 %v578, 24
      %v601 = vpop.permute.xlu0 %600
      %602 = vrot.lane.b32.xlu0 %v579, 24
      %v603 = vpop.permute.xlu0 %602
      %vm612 = vcmask 228544
      %613 = vst.msk [vmem:[#allocation3] sm:$0xff] %vm612, %v589
      %614 = vst.msk [vmem:[#allocation3 + $0x8] sm:$0xff] %vm612, %v591
      %615 = vst.msk [vmem:[#allocation3 + $0x10] sm:$0xff] %vm612, %v593
      %616 = vst.msk [vmem:[#allocation3 + $0x18] sm:$0xff] %vm612, %v595
      %617 = vst.msk [vmem:[#allocation3 + $0x20] sm:$0xff] %vm612, %v597
      %618 = vst.msk [vmem:[#allocation3 + $0x28] sm:$0xff] %vm612, %v599
      %619 = vst.msk [vmem:[#allocation3 + $0x30] sm:$0xff] %vm612, %v601
      %620 = vst.msk [vmem:[#allocation3 + $0x38] sm:$0xff] %vm612, %v603
      %v621 = vld [vmem:[%s571 + $0x1] sm:$0xff]
      %v622 = vld [vmem:[%s571 + $0x11] sm:$0xff]
      %v623 = vld [vmem:[%s571 + $0x21] sm:$0xff]
      %v624 = vld [vmem:[%s571 + $0x31] sm:$0xff]
      %v625 = vld [vmem:[%s571 + $0x41] sm:$0xff]
      %v626 = vld [vmem:[%s571 + $0x51] sm:$0xff]
      %v627 = vld [vmem:[%s571 + $0x61] sm:$0xff]
      %v628 = vld [vmem:[%s571 + $0x71] sm:$0xff]
      %637 = vrot.lane.b32.xlu0 %v621, 28
      %v638 = vpop.permute.xlu0 %637
      %639 = vrot.lane.b32.xlu0 %v622, 28
      %v640 = vpop.permute.xlu0 %639
      %641 = vrot.lane.b32.xlu0 %v623, 28
      %v642 = vpop.permute.xlu0 %641
      %643 = vrot.lane.b32.xlu0 %v624, 28
      %v644 = vpop.permute.xlu0 %643
      %645 = vrot.lane.b32.xlu0 %v625, 28
      %v646 = vpop.permute.xlu0 %645
      %647 = vrot.lane.b32.xlu0 %v626, 28
      %v648 = vpop.permute.xlu0 %647
      %649 = vrot.lane.b32.xlu0 %v627, 28
      %v650 = vpop.permute.xlu0 %649
      %651 = vrot.lane.b32.xlu0 %v628, 28
      %v652 = vpop.permute.xlu0 %651
      %vm661 = vcmask 261344
      %662 = vst.msk [vmem:[#allocation3] sm:$0xff] %vm661, %v638
      %663 = vst.msk [vmem:[#allocation3 + $0x8] sm:$0xff] %vm661, %v640
      %664 = vst.msk [vmem:[#allocation3 + $0x10] sm:$0xff] %vm661, %v642
      %665 = vst.msk [vmem:[#allocation3 + $0x18] sm:$0xff] %vm661, %v644
      %666 = vst.msk [vmem:[#allocation3 + $0x20] sm:$0xff] %vm661, %v646
      %667 = vst.msk [vmem:[#allocation3 + $0x28] sm:$0xff] %vm661, %v648
      %668 = vst.msk [vmem:[#allocation3 + $0x30] sm:$0xff] %vm661, %v650
      %669 = vst.msk [vmem:[#allocation3 + $0x38] sm:$0xff] %vm661, %v652
      %v670 = vld [vmem:[%s571 + $0x2] sm:$0xff]
      %v671 = vld [vmem:[%s571 + $0x12] sm:$0xff]
      %v672 = vld [vmem:[%s571 + $0x22] sm:$0xff]
      %v673 = vld [vmem:[%s571 + $0x32] sm:$0xff]
      %v674 = vld [vmem:[%s571 + $0x42] sm:$0xff]
      %v675 = vld [vmem:[%s571 + $0x52] sm:$0xff]
      %v676 = vld [vmem:[%s571 + $0x62] sm:$0xff]
      %v677 = vld [vmem:[%s571 + $0x72] sm:$0xff]
      %686 = vrot.lane.b32.xlu0 %v670, 32
      %v687 = vpop.permute.xlu0 %686
      %688 = vrot.lane.b32.xlu0 %v671, 32
      %v689 = vpop.permute.xlu0 %688
      %690 = vrot.lane.b32.xlu0 %v672, 32
      %v691 = vpop.permute.xlu0 %690
      %692 = vrot.lane.b32.xlu0 %v673, 32
      %v693 = vpop.permute.xlu0 %692
      %694 = vrot.lane.b32.xlu0 %v674, 32
      %v695 = vpop.permute.xlu0 %694
      %696 = vrot.lane.b32.xlu0 %v675, 32
      %v697 = vpop.permute.xlu0 %696
      %698 = vrot.lane.b32.xlu0 %v676, 32
      %v699 = vpop.permute.xlu0 %698
      %700 = vrot.lane.b32.xlu0 %v677, 32
      %v701 = vpop.permute.xlu0 %700
      %vm710 = vcmask 294144
      %711 = vst.msk [vmem:[#allocation3] sm:$0xff] %vm710, %v687
      %712 = vst.msk [vmem:[#allocation3 + $0x8] sm:$0xff] %vm710, %v689
      %713 = vst.msk [vmem:[#allocation3 + $0x10] sm:$0xff] %vm710, %v691
      %714 = vst.msk [vmem:[#allocation3 + $0x18] sm:$0xff] %vm710, %v693
      %715 = vst.msk [vmem:[#allocation3 + $0x20] sm:$0xff] %vm710, %v695
      %716 = vst.msk [vmem:[#allocation3 + $0x28] sm:$0xff] %vm710, %v697
      %717 = vst.msk [vmem:[#allocation3 + $0x30] sm:$0xff] %vm710, %v699
      %718 = vst.msk [vmem:[#allocation3 + $0x38] sm:$0xff] %vm710, %v701
      %v719 = vld [vmem:[#allocation3] sm:$0xff]
      %v720 = vld [vmem:[#allocation3 + $0x8] sm:$0xff]
      %v721 = vld [vmem:[#allocation3 + $0x10] sm:$0xff]
      %v722 = vld [vmem:[#allocation3 + $0x18] sm:$0xff]
      %v723 = vld [vmem:[#allocation3 + $0x20] sm:$0xff]
      %v724 = vld [vmem:[#allocation3 + $0x28] sm:$0xff]
      %v725 = vld [vmem:[#allocation3 + $0x30] sm:$0xff]
      %v726 = vld [vmem:[#allocation3 + $0x38] sm:$0xff]
      %v727 = vpack.c.bf16 %v720, %v719
      %v728 = vpack.c.bf16 %v722, %v721
      %v729 = vpack.c.bf16 %v724, %v723
      %v730 = vpack.c.bf16 %v726, %v725
      %v731 = vld [vmem:[%s1] sm:$0xf]
      %v732 = vld [vmem:[%s1 + $0x4] sm:$0xf]
      %v733 = vld [vmem:[%s1 + $0x8] sm:$0xf]
      %v734 = vld [vmem:[%s1 + $0xc] sm:$0xf]
      %v735 = vld [vmem:[%s1 + $0x10] sm:$0x3]
      %v741 = vunpack.c.l.b16 %v731
      %v742 = vunpack.c.l.b16 %v732
      %v743 = vunpack.c.l.b16 %v733
      %v744 = vunpack.c.l.b16 %v734
      %v745 = vunpack.c.l.b16 %v735
      %v746 = vpack.c.b16 %v742, %v741
      %v747 = vpack.c.b16 %v744, %v743
      %v748 = vpack.c.b16 %v745, %v745
      %vm751 = vcmask 293888
      %v753 = vsel %vm751, %v727, 0
      %v756 = vsel %vm751, %v728, 0
      %v759 = vsel %vm751, %v729, 0
      %v762 = vsel %vm751, %v730, 0
      %vm764 = vcmask 1041408
      %v766 = vsel %vm764, %v748, 0
      %768 = vmatprep.subr.bf16.mxu0 0
      %769 = vmatpush1.bf16.msra.mxu0 %v746
      %770 = vmatprep.subr.bf16.mxu0 0
      %771 = vmatpush1.bf16.msra.mxu0 %v747
      %772 = vmatprep.subr.bf16.mxu0 0
      %773 = vmatpush1.bf16.msra.mxu0 %v766
      %774 = vmatprep.subr.bf16.mxu0 0
      %775 = vmatpush1.bf16.msra.mxu0 0
      %776 = vmatprep.subr.bf16.mxu0 0
      %777 = vmatpush1.bf16.msra.mxu0 0
      %778 = vmatprep.subr.bf16.mxu0 0
      %779 = vmatpush1.bf16.msra.mxu0 0
      %780 = vmatprep.subr.bf16.mxu0 0
      %781 = vmatpush1.bf16.msra.mxu0 0
      %782 = vmatprep.subr.bf16.mxu0 0
      %783 = vmatpush1.bf16.msra.mxu0 0
      %784 = vmatprep.subr.bf16.mxu0 0
      %785 = vmatpush1.bf16.msra.mxu0 0
      %786 = vmatprep.subr.bf16.mxu0 0
      %787 = vmatpush1.bf16.msra.mxu0 0
      %788 = vmatprep.subr.bf16.mxu0 0
      %789 = vmatpush1.bf16.msra.mxu0 0
      %790 = vmatprep.subr.bf16.mxu0 0
      %791 = vmatpush1.bf16.msra.mxu0 0
      %792 = vmatprep.subr.bf16.mxu0 0
      %793 = vmatpush1.bf16.msra.mxu0 0
      %794 = vmatprep.subr.bf16.mxu0 0
      %795 = vmatpush1.bf16.msra.mxu0 0
      %796 = vmatprep.subr.bf16.mxu0 0
      %797 = vmatpush1.bf16.msra.mxu0 0
      %798 = vmatprep.subr.bf16.mxu0 0
      %799 = vmatpush1.bf16.msra.mxu0 0
      %800 = vmatprep.mubr.bf16.mxu0 0
      %801 = vmatmul.mubr.bf16.gmra.mrb[0].mxu0 %v753
      %v802 = vpop.f32.mrb[0].mxu0
      %v803 = vadd.f32 0.0, %v802
      %v804 = vpop.f32.mrb[0].mxu0
      %v805 = vpop.f32.mrb[0].mxu0
      %v806 = vadd.f32 0.0, %v805
      %v807 = vpop.f32.mrb[0].mxu0
      %808 = vmatprep.mubr.bf16.mxu0 0
      %809 = vmatmul.mubr.bf16.gmra.mrb[0].mxu0 %v756
      %v810 = vpop.f32.mrb[0].mxu0
      %v811 = vadd.f32 0.0, %v810
      %v812 = vpop.f32.mrb[0].mxu0
      %v813 = vpop.f32.mrb[0].mxu0
      %v814 = vadd.f32 0.0, %v813
      %v815 = vpop.f32.mrb[0].mxu0
      %816 = vmatprep.mubr.bf16.mxu0 0
      %817 = vmatmul.mubr.bf16.gmra.mrb[0].mxu0 %v759
      %v818 = vpop.f32.mrb[0].mxu0
      %v819 = vadd.f32 0.0, %v818
      %v820 = vpop.f32.mrb[0].mxu0
      %v821 = vpop.f32.mrb[0].mxu0
      %v822 = vadd.f32 0.0, %v821
      %v823 = vpop.f32.mrb[0].mxu0
      %824 = vmatprep.mubr.bf16.mxu0 0
      %825 = vmatmul.mubr.bf16.gmra.mrb[0].mxu0 %v762
      %v826 = vpop.f32.mrb[0].mxu0
      %v827 = vadd.f32 0.0, %v826
      %v828 = vpop.f32.mrb[0].mxu0
      %v829 = vpop.f32.mrb[0].mxu0
      %v830 = vadd.f32 0.0, %v829
      %v831 = vpop.f32.mrb[0].mxu0
      %832 = vdwg.mxu0
      %v833 = vld [vmem:[#allocation5] sm:$0x1]
      %vm834 = vcmask 64512
      %v835 = vsel %vm834, %v803, 0.0
      %v836 = vsel %vm834, %v806, 0.0
      %v837 = vadd.f32 %v835, %v836
      %v838 = vsel %vm834, %v811, 0.0
      %v839 = vadd.f32 %v837, %v838
      %v840 = vsel %vm834, %v814, 0.0
      %v841 = vadd.f32 %v839, %v840
      %v842 = vsel %vm834, %v819, 0.0
      %v843 = vadd.f32 %v841, %v842
      %v844 = vsel %vm834, %v822, 0.0
      %v845 = vadd.f32 %v843, %v844
      %v846 = vsel %vm834, %v827, 0.0
      %v847 = vadd.f32 %v845, %v846
      %v848 = vsel %vm834, %v830, 0.0
      %v849 = vadd.f32 %v847, %v848
      %v850 = vrot.slane %v849, 4
      %v851 = vadd.f32 %v849, %v850
      %v852 = vrot.slane %v851, 2
      %v853 = vadd.f32 %v851, %v852
      %v854 = vrot.slane %v853, 1
      %v855 = vadd.f32 %v853, %v854
      %v856 = vadd.f32 %v833, %v855
      %vm857 = vcmask 57344
      %858 = vst.msk [vmem:[#allocation5] sm:$0x1] %vm857, %v856
      %v859 = vld [vmem:[#allocation6] sm:$0x1]
      %v860 = vmul.f32 %v803, %v803
      %v861 = vmul.f32 %v806, %v806
      %v862 = vmul.f32 %v811, %v811
      %v863 = vmul.f32 %v814, %v814
      %v864 = vmul.f32 %v819, %v819
      %v865 = vmul.f32 %v822, %v822
      %v866 = vmul.f32 %v827, %v827
      %v867 = vmul.f32 %v830, %v830
      %v868 = vsel %vm834, %v860, 0.0
      %v869 = vsel %vm834, %v861, 0.0
      %v870 = vadd.f32 %v868, %v869
      %v871 = vsel %vm834, %v862, 0.0
      %v872 = vadd.f32 %v870, %v871
      %v873 = vsel %vm834, %v863, 0.0
      %v874 = vadd.f32 %v872, %v873
      %v875 = vsel %vm834, %v864, 0.0
      %v876 = vadd.f32 %v874, %v875
      %v877 = vsel %vm834, %v865, 0.0
      %v878 = vadd.f32 %v876, %v877
      %v879 = vsel %vm834, %v866, 0.0
      %v880 = vadd.f32 %v878, %v879
      %v881 = vsel %vm834, %v867, 0.0
      %v882 = vadd.f32 %v880, %v881
      %v883 = vrot.slane %v882, 4
      %v884 = vadd.f32 %v882, %v883
      %v885 = vrot.slane %v884, 2
      %v886 = vadd.f32 %v884, %v885
      %v887 = vrot.slane %v886, 1
      %v888 = vadd.f32 %v886, %v887
      %v889 = vadd.f32 %v859, %v888
      %890 = vst.msk [vmem:[#allocation6] sm:$0x1] %vm857, %v889
      %s891 = smul.u32 %s15, 64
      %s892 = scalar_lea.vmem [#allocation4], %s891
      %893 = vst.msk [vmem:[%s892] sm:$0xff] %vm834, %v803
      %894 = vst.msk [vmem:[%s892 + $0x8] sm:$0xff] %vm834, %v806
      %895 = vst.msk [vmem:[%s892 + $0x10] sm:$0xff] %vm834, %v811
      %896 = vst.msk [vmem:[%s892 + $0x18] sm:$0xff] %vm834, %v814
      %897 = vst.msk [vmem:[%s892 + $0x20] sm:$0xff] %vm834, %v819
      %898 = vst.msk [vmem:[%s892 + $0x28] sm:$0xff] %vm834, %v822
      %899 = vst.msk [vmem:[%s892 + $0x30] sm:$0xff] %vm834, %v827
      %900 = vst.msk [vmem:[%s892 + $0x38] sm:$0xff] %vm834, %v830
      %p901 = scmp.eq.s32.totalorder %s15, 1
      // Predicated region
      $region41: #{encode_down.2} parent=35 // pred_check
        %p902 = pneg %p901
      $region42: #{encode_down.2} parent=35 // pred_check_branch
        %904 = sbr.rel (%p902) target = $region44
      $region43: #{encode_down.2} parent=35 // pred_region
        %v905 = vld [vmem:[#allocation5] sm:$0x1]
        %v906 = vmul.f32 %v905, 0.0078125
        %v907 = vld [vmem:[#allocation6] sm:$0x1]
        %v908 = vmul.f32 %v907, 0.0078125
        %v909 = vmul.f32 %v906, %v906
        %v910 = vsub.f32 %v908, %v909
        %v911 = vld [vmem:[%s2] sm:$0x1]
        %v912 = vadd.f32 %v910, 1e-05
        %v913 = vrsqrt.pop %v912
        %v914 = vmul.f32 %v911, %v913
        %v915 = vld [vmem:[%s3] sm:$0x1]
        %v916 = vmul.f32 %v906, %v914
        %v917 = vsub.f32 %v915, %v916
        %v918 = vld [vmem:[#allocation4] sm:$0xff]
        %v919 = vld [vmem:[#allocation4 + $0x8] sm:$0xff]
        %v920 = vld [vmem:[#allocation4 + $0x10] sm:$0xff]
        %v921 = vld [vmem:[#allocation4 + $0x18] sm:$0xff]
        %v922 = vld [vmem:[#allocation4 + $0x20] sm:$0xff]
        %v923 = vld [vmem:[#allocation4 + $0x28] sm:$0xff]
        %v924 = vld [vmem:[#allocation4 + $0x30] sm:$0xff]
        %v925 = vld [vmem:[#allocation4 + $0x38] sm:$0xff]
        %v926 = vld [vmem:[#allocation4 + $0x40] sm:$0xff]
        %v927 = vld [vmem:[#allocation4 + $0x48] sm:$0xff]
        %v928 = vld [vmem:[#allocation4 + $0x50] sm:$0xff]
        %v929 = vld [vmem:[#allocation4 + $0x58] sm:$0xff]
        %v930 = vld [vmem:[#allocation4 + $0x60] sm:$0xff]
        %v931 = vld [vmem:[#allocation4 + $0x68] sm:$0xff]
        %v932 = vld [vmem:[#allocation4 + $0x70] sm:$0xff]
        %v933 = vld [vmem:[#allocation4 + $0x78] sm:$0xff]
        %v935 = vlaneseq
        %v936 = vshrl.u32 %v935, 7
        %v937 = vsub.s32 0, %v936
        %v938 = vrot.slane %v914, %v937
        %v940 = vmul.f32 %v918, %v938
        %v941 = vmul.f32 %v919, %v938
        %v942 = vmul.f32 %v920, %v938
        %v943 = vmul.f32 %v921, %v938
        %v944 = vmul.f32 %v922, %v938
        %v945 = vmul.f32 %v923, %v938
        %v946 = vmul.f32 %v924, %v938
        %v947 = vmul.f32 %v925, %v938
        %v948 = vmul.f32 %v926, %v938
        %v949 = vmul.f32 %v927, %v938
        %v950 = vmul.f32 %v928, %v938
        %v951 = vmul.f32 %v929, %v938
        %v952 = vmul.f32 %v930, %v938
        %v953 = vmul.f32 %v931, %v938
        %v954 = vmul.f32 %v932, %v938
        %v955 = vmul.f32 %v933, %v938
        %v957 = vlaneseq
        %v958 = vshrl.u32 %v957, 7
        %v959 = vsub.s32 0, %v958
        %v960 = vrot.slane %v917, %v959
        %v962 = vadd.f32 %v940, %v960
        %v963 = vadd.f32 %v941, %v960
        %v964 = vadd.f32 %v942, %v960
        %v965 = vadd.f32 %v943, %v960
        %v966 = vadd.f32 %v944, %v960
        %v967 = vadd.f32 %v945, %v960
        %v968 = vadd.f32 %v946, %v960
        %v969 = vadd.f32 %v947, %v960
        %v970 = vadd.f32 %v948, %v960
        %v971 = vadd.f32 %v949, %v960
        %v972 = vadd.f32 %v950, %v960
        %v973 = vadd.f32 %v951, %v960
        %v974 = vadd.f32 %v952, %v960
        %v975 = vadd.f32 %v953, %v960
        %v976 = vadd.f32 %v954, %v960
        %v977 = vadd.f32 %v955, %v960
        %v978 = vmax.f32 %v962, 0.0
        %v979 = vmax.f32 %v963, 0.0
        %v980 = vmax.f32 %v964, 0.0
        %v981 = vmax.f32 %v965, 0.0
        %v982 = vmax.f32 %v966, 0.0
        %v983 = vmax.f32 %v967, 0.0
        %v984 = vmax.f32 %v968, 0.0
        %v985 = vmax.f32 %v969, 0.0
        %v986 = vmax.f32 %v970, 0.0
        %v987 = vmax.f32 %v971, 0.0
        %v988 = vmax.f32 %v972, 0.0
        %v989 = vmax.f32 %v973, 0.0
        %v990 = vmax.f32 %v974, 0.0
        %v991 = vmax.f32 %v975, 0.0
        %v992 = vmax.f32 %v976, 0.0
        %v993 = vmax.f32 %v977, 0.0
        %994 = vst.msk [vmem:[%s4] sm:$0xff] %vm834, %v978
        %995 = vst.msk [vmem:[%s4 + $0x8] sm:$0xff] %vm834, %v979
        %996 = vst.msk [vmem:[%s4 + $0x10] sm:$0xff] %vm834, %v980
        %997 = vst.msk [vmem:[%s4 + $0x18] sm:$0xff] %vm834, %v981
        %998 = vst.msk [vmem:[%s4 + $0x20] sm:$0xff] %vm834, %v982
        %999 = vst.msk [vmem:[%s4 + $0x28] sm:$0xff] %vm834, %v983
        %1000 = vst.msk [vmem:[%s4 + $0x30] sm:$0xff] %vm834, %v984
        %1001 = vst.msk [vmem:[%s4 + $0x38] sm:$0xff] %vm834, %v985
        %1002 = vst.msk [vmem:[%s4 + $0x40] sm:$0xff] %vm834, %v986
        %1003 = vst.msk [vmem:[%s4 + $0x48] sm:$0xff] %vm834, %v987
        %1004 = vst.msk [vmem:[%s4 + $0x50] sm:$0xff] %vm834, %v988
        %1005 = vst.msk [vmem:[%s4 + $0x58] sm:$0xff] %vm834, %v989
        %1006 = vst.msk [vmem:[%s4 + $0x60] sm:$0xff] %vm834, %v990
        %1007 = vst.msk [vmem:[%s4 + $0x68] sm:$0xff] %vm834, %v991
        %1008 = vst.msk [vmem:[%s4 + $0x70] sm:$0xff] %vm834, %v992
        %1009 = vst.msk [vmem:[%s4 + $0x78] sm:$0xff] %vm834, %v993
      $region44: #{encode_down.2} parent=35 // pred_fallthru
        _
      // Predicated region
      $region45: #{encode_down.2} parent=35 // pred_check
        %p1010 = pneg %p117
      $region46: #{encode_down.2} parent=35 // pred_check_branch
        %1012 = sbr.rel (%p1010) target = $region48
      $region47: #{encode_down.2} parent=35 // pred_region
        _
      $region48: #{encode_down.2} parent=35 // pred_fallthru
        _
      // Predicated region
      $region49: #{encode_down.2} parent=35 // pred_check
        %p1013 = pneg %p117
      $region50: #{encode_down.2} parent=35 // pred_check_branch
        %1015 = sbr.rel (%p1013) target = $region52
      $region51: #{encode_down.2} parent=35 // pred_region
        _
      $region52: #{encode_down.2} parent=35 // pred_fallthru
        _
    $region36: #{encode_down.2} parent=5 // pred_fallthru
      _
    %p1016 = scmp.le.s32.totalorder 2, %s10
    // Predicated region
    $region53: #{encode_down.2} parent=5 // pred_check
      %p1017 = pneg %p1016
    $region54: #{encode_down.2} parent=5 // pred_check_branch
      %1019 = sbr.rel (%p1017) target = $region56
    $region55: #{encode_down.2} parent=5 // pred_region
      %s1020 = ssub.s32 %s10, 2
    $region56: #{encode_down.2} parent=5 // pred_fallthru
      _
  $region6: #{encode_down.2} parent=0 // loop_footer
    %s14 = sadd.s32 1, %s10
  $region7: #{encode_down.2} parent=0 // loop_footer_branch
    %9 = sbr.rel target = $region3
  $region8: #{encode_down.2} parent=0 // loop_exit
    _

// kernel: encode_down.3
$region0: #{encode_down.3}
  #allocation0 [shape = 'u32[]', space=smem, size = 0x4, offset = 0x4, fixed_abs, tag = 'smem constant byte address 0x4 - core index']
  #allocation1 [shape = 'u32[144,128]{1,0:T(1,128)}', space=vmem, size = 0x12000, scoped, tag = 'internal scratch']
  #allocation2 [shape = 'f32[10,10,8]{2,1,0:T(8,128)}', space=vmem, size = 0x14000, scoped, tag = 'scratch operand']
  #allocation3 [shape = 'f32[64,72]{1,0:T(8,128)}', space=vmem, size = 0x8000, scoped, tag = 'scratch operand']
  #allocation4 [shape = 'f32[128,8]{1,0:T(8,128)}', space=vmem, size = 0x10000, scoped, tag = 'scratch operand']
  #allocation5 [shape = 'f32[1,8]{1,0:T(1,128)}', space=vmem, size = 0x200, scoped, tag = 'scratch operand']
  #allocation6 [shape = 'f32[1,8]{1,0:T(1,128)}', space=vmem, size = 0x200, scoped, tag = 'scratch operand']
  %s0 = inlined_call_operand.vmem [shape: f32[2,8,8,8], index: 0, kind: input, shape index: {}]
  %s1 = inlined_call_operand.vmem [shape: bf16[72,8], index: 1, kind: input, shape index: {}]
  %s2 = inlined_call_operand.vmem [shape: f32[1,8], index: 2, kind: input, shape index: {}]
  %s3 = inlined_call_operand.vmem [shape: f32[1,8], index: 3, kind: input, shape index: {}]
  %s4 = inlined_call_operand.hbm [shape: f32[2,8,8,8], index: 4, kind: output, shape index: {}]
  %s5 = sld [smem:[#allocation0]]
  $region57: #{encode_down.3} parent=0
    _
  %s7 = ssub.s32 1, %s5
  %s8 = scalar_select 0, %s7, %s5
  $region1: #{encode_down.3} parent=0
    #allocation7 [shape = 'u8[65536]{0}', space=vmem, size = 0x10000, scoped, tag = 'output window, operand 0, single buffered']
    #allocation8 [shape = 's32[2]{0}', space=sflag, size = 0x8, scoped, tag = 'scoped memory for encode_down.3']
    %9 = vsyncpa [#allocation8], 0
    loop: start=0, step=1, limit=4
    $region2: #{encode_down.3} parent=1 // loop_pre_header
      _
    $region3: #{encode_down.3} parent=1 // loop_header
      %s11 = sphi 0, %s15
      %p12 = scmp.ge.s32.totalorder %s11, 4
      %s21 = sphi 0, %s23
      %s24 = sphi 0, %s21
      %s25 = sphi 0, %s24
      %s41 = sphi 0, %s25
      %s45 = sphi 0, %s45
      %s47 = sphi 0, %s45
      %s48 = sphi 0, %s47
      %s62 = sphi 0, %s48
      %s66 = sphi 0, %s66
      %s68 = sphi 0, %s66
      %s69 = sphi 0, %s68
      %s83 = sphi 0, %s69
      %s87 = sphi 0, %s87
      %s89 = sphi 0, %s87
      %s90 = sphi 0, %s89
      %s104 = sphi 0, %s90
      %s108 = sphi 0, %s108
      %s110 = sphi 0, %s108
      %s111 = sphi 0, %s110
      %s125 = sphi 0, %s111
    $region4: #{encode_down.3} parent=1 // loop_header_branch
      %14 = sbr.rel (%p12) target = $region8
    $region5: #{encode_down.3} parent=1 // loop_body
      %s16 = ssub.s32 %s11, 1
      %s17 = ssub.s32 %s11, 2
      %s18 = sadd.s32 %s11, 1
      %s19 = ssub.s32 %s11, %s18
      %p20 = scmp.eq.s32.totalorder %s19, 0
      %s22 = sadd.s32 %s21, 1
      %s23 = scalar_select %p20, %s21, %s22
      %p26 = pneg %p20
      %p27 = scmp.eq.s32.totalorder %s11, 1
      %p28 = por %p26, %p27
      %p29 = scmp.ne.s32.totalorder %s21, %s24
      %p30 = scmp.eq.s32.totalorder %s11, 0
      %p31 = por %p29, %p30
      %p32 = scmp.ne.s32.totalorder %s21, %s24
      %p33 = scmp.eq.s32.totalorder %s16, 1
      %p34 = por %p32, %p33
      %p35 = scmp.ne.s32.totalorder %s24, %s25
      %p36 = scmp.eq.s32.totalorder %s16, 0
      %p37 = por %p35, %p36
      %p38 = scmp.ne.s32.totalorder %s24, %s25
      %p39 = scmp.eq.s32.totalorder %s17, 1
      %p40 = por %p38, %p39
      %p42 = scmp.ne.s32.totalorder %s25, %s41
      %p43 = scmp.eq.s32.totalorder %s17, 0
      %p44 = por %p42, %p43
      %s46 = sadd.s32 %s45, 1
      %p49 = scmp.eq.s32.totalorder %s11, 1
      %p50 = scmp.ne.s32.totalorder %s45, %s47
      %p51 = scmp.eq.s32.totalorder %s11, 0
      %p52 = por %p50, %p51
      %p53 = scmp.ne.s32.totalorder %s45, %s47
      %p54 = scmp.eq.s32.totalorder %s16, 1
      %p55 = por %p53, %p54
      %p56 = scmp.ne.s32.totalorder %s47, %s48
      %p57 = scmp.eq.s32.totalorder %s16, 0
      %p58 = por %p56, %p57
      %p59 = scmp.ne.s32.totalorder %s47, %s48
      %p60 = scmp.eq.s32.totalorder %s17, 1
      %p61 = por %p59, %p60
      %p63 = scmp.ne.s32.totalorder %s48, %s62
      %p64 = scmp.eq.s32.totalorder %s17, 0
      %p65 = por %p63, %p64
      %s67 = sadd.s32 %s66, 1
      %p70 = scmp.eq.s32.totalorder %s11, 1
      %p71 = scmp.ne.s32.totalorder %s66, %s68
      %p72 = scmp.eq.s32.totalorder %s11, 0
      %p73 = por %p71, %p72
      %p74 = scmp.ne.s32.totalorder %s66, %s68
      %p75 = scmp.eq.s32.totalorder %s16, 1
      %p76 = por %p74, %p75
      %p77 = scmp.ne.s32.totalorder %s68, %s69
      %p78 = scmp.eq.s32.totalorder %s16, 0
      %p79 = por %p77, %p78
      %p80 = scmp.ne.s32.totalorder %s68, %s69
      %p81 = scmp.eq.s32.totalorder %s17, 1
      %p82 = por %p80, %p81
      %p84 = scmp.ne.s32.totalorder %s69, %s83
      %p85 = scmp.eq.s32.totalorder %s17, 0
      %p86 = por %p84, %p85
      %s88 = sadd.s32 %s87, 1
      %p91 = scmp.eq.s32.totalorder %s11, 1
      %p92 = scmp.ne.s32.totalorder %s87, %s89
      %p93 = scmp.eq.s32.totalorder %s11, 0
      %p94 = por %p92, %p93
      %p95 = scmp.ne.s32.totalorder %s87, %s89
      %p96 = scmp.eq.s32.totalorder %s16, 1
      %p97 = por %p95, %p96
      %p98 = scmp.ne.s32.totalorder %s89, %s90
      %p99 = scmp.eq.s32.totalorder %s16, 0
      %p100 = por %p98, %p99
      %p101 = scmp.ne.s32.totalorder %s89, %s90
      %p102 = scmp.eq.s32.totalorder %s17, 1
      %p103 = por %p101, %p102
      %p105 = scmp.ne.s32.totalorder %s90, %s104
      %p106 = scmp.eq.s32.totalorder %s17, 0
      %p107 = por %p105, %p106
      %s109 = sadd.s32 %s108, 1
      %p112 = scmp.eq.s32.totalorder %s11, 1
      %p113 = scmp.ne.s32.totalorder %s108, %s110
      %p114 = scmp.eq.s32.totalorder %s11, 0
      %p115 = por %p113, %p114
      %p116 = scmp.ne.s32.totalorder %s108, %s110
      %p117 = scmp.eq.s32.totalorder %s16, 1
      %p118 = por %p116, %p117
      %p119 = scmp.ne.s32.totalorder %s110, %s111
      %p120 = scmp.eq.s32.totalorder %s16, 0
      %p121 = por %p119, %p120
      %p122 = scmp.ne.s32.totalorder %s110, %s111
      %p123 = scmp.eq.s32.totalorder %s17, 1
      %p124 = por %p122, %p123
      %p126 = scmp.ne.s32.totalorder %s111, %s125
      %p127 = scmp.eq.s32.totalorder %s17, 0
      %p128 = por %p126, %p127
      %p129 = scmp.le.s32.totalorder 1, %s11
      %p130 = scmp.lt.s32.totalorder %s11, 3
      %p131 = pnand %p129, %p130
      %p132 = pneg %p131
      // Predicated region
      $region9: #{encode_down.3} parent=5 // pred_check
        _
      $region10: #{encode_down.3} parent=5 // pred_check_branch
        %134 = sbr.rel (%p131) target = $region12
      $region11: #{encode_down.3} parent=5 // pred_region
        %s135 = ssub.s32 %s11, 1
        // Predicated region
        $region13: #{encode_down.3} parent=11 // pred_check
          %p136 = pneg %p58
        $region14: #{encode_down.3} parent=11 // pred_check_branch
          %138 = sbr.rel (%p136) target = $region16
        $region15: #{encode_down.3} parent=11 // pred_region
          _
        $region16: #{encode_down.3} parent=11 // pred_fallthru
          _
        // Predicated region
        $region17: #{encode_down.3} parent=11 // pred_check
          %p139 = pneg %p79
        $region18: #{encode_down.3} parent=11 // pred_check_branch
          %141 = sbr.rel (%p139) target = $region20
        $region19: #{encode_down.3} parent=11 // pred_region
          _
        $region20: #{encode_down.3} parent=11 // pred_fallthru
          _
        // Predicated region
        $region21: #{encode_down.3} parent=11 // pred_check
          %p142 = pneg %p100
        $region22: #{encode_down.3} parent=11 // pred_check_branch
          %144 = sbr.rel (%p142) target = $region24
        $region23: #{encode_down.3} parent=11 // pred_region
          _
        $region24: #{encode_down.3} parent=11 // pred_fallthru
          _
      $region12: #{encode_down.3} parent=5 // pred_fallthru
        _
      %p145 = scmp.lt.s32.totalorder %s11, 2
      // Predicated region
      $region25: #{encode_down.3} parent=5 // pred_check
        %p146 = pneg %p145
      $region26: #{encode_down.3} parent=5 // pred_check_branch
        %148 = sbr.rel (%p146) target = $region28
      $region27: #{encode_down.3} parent=5 // pred_region
        // Predicated region
        $region29: #{encode_down.3} parent=27 // pred_check
          %p149 = pneg %p31
        $region30: #{encode_down.3} parent=27 // pred_check_branch
          %151 = sbr.rel (%p149) target = $region32
        $region31: #{encode_down.3} parent=27 // pred_region
          %p152 = scmp.lt.s32.totalorder %s11, 1
          %s153 = scalar_select %p152, %s11, 1
          %s154 = smul.addr %s153, 8
          %s155 = smul.addr %s154, 8
          %s156 = scalar_lea.vmem %s0, %s155
        $region32: #{encode_down.3} parent=27 // pred_fallthru
          _
      $region28: #{encode_down.3} parent=5 // pred_fallthru
        _
      %p157 = scmp.le.s32.totalorder 1, %s11
      %p158 = scmp.lt.s32.totalorder %s11, 3
      %p159 = pnand %p157, %p158
      %p160 = pneg %p159
      // Predicated region
      $region33: #{encode_down.3} parent=5 // pred_check
        _
      $region34: #{encode_down.3} parent=5 // pred_check_branch
        %162 = sbr.rel (%p159) target = $region36
      $region35: #{encode_down.3} parent=5 // pred_region
        %s163 = ssub.s32 %s11, 1
        %p164 = scmp.lt.s32.totalorder %s16, 1
        %s165 = scalar_select %p164, %s16, 1
        %s166 = smul.addr %s165, 8
        %s167 = smul.addr %s166, 8
        %s168 = scalar_lea.vmem %s0, %s167
        %p169 = pneg %p37
        %p170 = pneg %p34
        %p171 = pneg %p58
        %p172 = pneg %p55
        %p173 = pneg %p79
        %p174 = pneg %p76
        %p175 = pneg %p100
        %p176 = pneg %p97
        %p177 = pneg %p121
        %p178 = pneg %p118
        %p179 = scmp.lt.s32.totalorder %s16, 1
        %s180 = scalar_select %p179, %s16, 1
        %s181 = smul.addr %s180, 8
        %s182 = smul.addr %s181, 8
        %s183 = scalar_lea.vmem %s0, %s182
        %p185 = scmp.eq.s32.totalorder %s16, 0
        // Predicated region
        $region37: #{encode_down.3} parent=35 // pred_check
          %p186 = pneg %p185
        $region38: #{encode_down.3} parent=35 // pred_check_branch
          %188 = sbr.rel (%p186) target = $region40
        $region39: #{encode_down.3} parent=35 // pred_region
          %vm189 = vcmask 64512
          %190 = vst.msk [vmem:[#allocation2] sm:$0xff] %vm189, 0.0
          %vm191 = vcmask 58368
          %192 = vst.msk [vmem:[#allocation2 + $0x8] sm:$0x3] %vm191, 0.0
          %193 = vst.msk [vmem:[#allocation2 + $0x10] sm:$0xff] %vm189, 0.0
          %194 = vst.msk [vmem:[#allocation2 + $0x18] sm:$0x3] %vm191, 0.0
          %195 = vst.msk [vmem:[#allocation2 + $0x20] sm:$0xff] %vm189, 0.0
          %196 = vst.msk [vmem:[#allocation2 + $0x28] sm:$0x3] %vm191, 0.0
          %197 = vst.msk [vmem:[#allocation2 + $0x30] sm:$0xff] %vm189, 0.0
          %198 = vst.msk [vmem:[#allocation2 + $0x38] sm:$0x3] %vm191, 0.0
          %199 = vst.msk [vmem:[#allocation2 + $0x40] sm:$0xff] %vm189, 0.0
          %200 = vst.msk [vmem:[#allocation2 + $0x48] sm:$0x3] %vm191, 0.0
          %201 = vst.msk [vmem:[#allocation2 + $0x50] sm:$0xff] %vm189, 0.0
          %202 = vst.msk [vmem:[#allocation2 + $0x58] sm:$0x3] %vm191, 0.0
          %203 = vst.msk [vmem:[#allocation2 + $0x60] sm:$0xff] %vm189, 0.0
          %204 = vst.msk [vmem:[#allocation2 + $0x68] sm:$0x3] %vm191, 0.0
          %205 = vst.msk [vmem:[#allocation2 + $0x70] sm:$0xff] %vm189, 0.0
          %206 = vst.msk [vmem:[#allocation2 + $0x78] sm:$0x3] %vm191, 0.0
          %207 = vst.msk [vmem:[#allocation2 + $0x80] sm:$0xff] %vm189, 0.0
          %208 = vst.msk [vmem:[#allocation2 + $0x88] sm:$0x3] %vm191, 0.0
          %209 = vst.msk [vmem:[#allocation2 + $0x90] sm:$0xff] %vm189, 0.0
          %210 = vst.msk [vmem:[#allocation2 + $0x98] sm:$0x3] %vm191, 0.0
          %vm211 = vcmask 57344
          %212 = vst.msk [vmem:[#allocation5] sm:$0x1] %vm211, 0.0
          %213 = vst.msk [vmem:[#allocation6] sm:$0x1] %vm211, 0.0
        $region40: #{encode_down.3} parent=35 // pred_fallthru
          _
        %v214 = vld [vmem:[%s183] sm:$0xff]
        %v215 = vld [vmem:[%s183 + $0x8] sm:$0xff]
        %v216 = vld [vmem:[%s183 + $0x10] sm:$0xff]
        %v217 = vld [vmem:[%s183 + $0x18] sm:$0xff]
        %v218 = vld [vmem:[%s183 + $0x20] sm:$0xff]
        %v219 = vld [vmem:[%s183 + $0x28] sm:$0xff]
        %v220 = vld [vmem:[%s183 + $0x30] sm:$0xff]
        %v221 = vld [vmem:[%s183 + $0x38] sm:$0xff]
        %s222 = scalar_lea.vmem [#allocation2], 16
        %vm223 = vcmask 64512
        %224 = vst.msk [vmem:[%s222 + $0x1] sm:$0xff] %vm223, %v214
        %225 = vst.msk [vmem:[%s222 + $0x11] sm:$0xff] %vm223, %v215
        %226 = vst.msk [vmem:[%s222 + $0x21] sm:$0xff] %vm223, %v216
        %227 = vst.msk [vmem:[%s222 + $0x31] sm:$0xff] %vm223, %v217
        %228 = vst.msk [vmem:[%s222 + $0x41] sm:$0xff] %vm223, %v218
        %229 = vst.msk [vmem:[%s222 + $0x51] sm:$0xff] %vm223, %v219
        %230 = vst.msk [vmem:[%s222 + $0x61] sm:$0xff] %vm223, %v220
        %231 = vst.msk [vmem:[%s222 + $0x71] sm:$0xff] %vm223, %v221
        %v232 = vld [vmem:[#allocation2] sm:$0xff]
        %v233 = vld [vmem:[#allocation2 + $0x10] sm:$0xff]
        %v234 = vld [vmem:[#allocation2 + $0x20] sm:$0xff]
        %v235 = vld [vmem:[#allocation2 + $0x30] sm:$0xff]
        %v236 = vld [vmem:[#allocation2 + $0x40] sm:$0xff]
        %v237 = vld [vmem:[#allocation2 + $0x50] sm:$0xff]
        %v238 = vld [vmem:[#allocation2 + $0x60] sm:$0xff]
        %v239 = vld [vmem:[#allocation2 + $0x70] sm:$0xff]
        %240 = vst.msk [vmem:[#allocation3] sm:$0xff] %vm223, %v232
        %241 = vst.msk [vmem:[#allocation3 + $0x8] sm:$0xff] %vm223, %v233
        %242 = vst.msk [vmem:[#allocation3 + $0x10] sm:$0xff] %vm223, %v234
        %243 = vst.msk [vmem:[#allocation3 + $0x18] sm:$0xff] %vm223, %v235
        %244 = vst.msk [vmem:[#allocation3 + $0x20] sm:$0xff] %vm223, %v236
        %245 = vst.msk [vmem:[#allocation3 + $0x28] sm:$0xff] %vm223, %v237
        %246 = vst.msk [vmem:[#allocation3 + $0x30] sm:$0xff] %vm223, %v238
        %247 = vst.msk [vmem:[#allocation3 + $0x38] sm:$0xff] %vm223, %v239
        %v248 = vld [vmem:[#allocation2 + $0x1] sm:$0xff]
        %v249 = vld [vmem:[#allocation2 + $0x11] sm:$0xff]
        %v250 = vld [vmem:[#allocation2 + $0x21] sm:$0xff]
        %v251 = vld [vmem:[#allocation2 + $0x31] sm:$0xff]
        %v252 = vld [vmem:[#allocation2 + $0x41] sm:$0xff]
        %v253 = vld [vmem:[#allocation2 + $0x51] sm:$0xff]
        %v254 = vld [vmem:[#allocation2 + $0x61] sm:$0xff]
        %v255 = vld [vmem:[#allocation2 + $0x71] sm:$0xff]
        %264 = vrot.lane.b32.xlu0 %v248, 8
        %v265 = vpop.permute.xlu0 %264
        %266 = vrot.lane.b32.xlu0 %v249, 8
        %v267 = vpop.permute.xlu0 %266
        %268 = vrot.lane.b32.xlu0 %v250, 8
        %v269 = vpop.permute.xlu0 %268
        %270 = vrot.lane.b32.xlu0 %v251, 8
        %v271 = vpop.permute.xlu0 %270
        %272 = vrot.lane.b32.xlu0 %v252, 8
        %v273 = vpop.permute.xlu0 %272
        %274 = vrot.lane.b32.xlu0 %v253, 8
        %v275 = vpop.permute.xlu0 %274
        %276 = vrot.lane.b32.xlu0 %v254, 8
        %v277 = vpop.permute.xlu0 %276
        %278 = vrot.lane.b32.xlu0 %v255, 8
        %v279 = vpop.permute.xlu0 %278
        %vm288 = vcmask 130112
        %289 = vst.msk [vmem:[#allocation3] sm:$0xff] %vm288, %v265
        %290 = vst.msk [vmem:[#allocation3 + $0x8] sm:$0xff] %vm288, %v267
        %291 = vst.msk [vmem:[#allocation3 + $0x10] sm:$0xff] %vm288, %v269
        %292 = vst.msk [vmem:[#allocation3 + $0x18] sm:$0xff] %vm288, %v271
        %293 = vst.msk [vmem:[#allocation3 + $0x20] sm:$0xff] %vm288, %v273
        %294 = vst.msk [vmem:[#allocation3 + $0x28] sm:$0xff] %vm288, %v275
        %295 = vst.msk [vmem:[#allocation3 + $0x30] sm:$0xff] %vm288, %v277
        %296 = vst.msk [vmem:[#allocation3 + $0x38] sm:$0xff] %vm288, %v279
        %v297 = vld [vmem:[#allocation2 + $0x2] sm:$0xff]
        %v298 = vld [vmem:[#allocation2 + $0x12] sm:$0xff]
        %v299 = vld [vmem:[#allocation2 + $0x22] sm:$0xff]
        %v300 = vld [vmem:[#allocation2 + $0x32] sm:$0xff]
        %v301 = vld [vmem:[#allocation2 + $0x42] sm:$0xff]
        %v302 = vld [vmem:[#allocation2 + $0x52] sm:$0xff]
        %v303 = vld [vmem:[#allocation2 + $0x62] sm:$0xff]
        %v304 = vld [vmem:[#allocation2 + $0x72] sm:$0xff]
        %313 = vrot.lane.b32.xlu0 %v297, 16
        %v314 = vpop.permute.xlu0 %313
        %315 = vrot.lane.b32.xlu0 %v298, 16
        %v316 = vpop.permute.xlu0 %315
        %317 = vrot.lane.b32.xlu0 %v299, 16
        %v318 = vpop.permute.xlu0 %317
        %319 = vrot.lane.b32.xlu0 %v300, 16
        %v320 = vpop.permute.xlu0 %319
        %321 = vrot.lane.b32.xlu0 %v301, 16
        %v322 = vpop.permute.xlu0 %321
        %323 = vrot.lane.b32.xlu0 %v302, 16
        %v324 = vpop.permute.xlu0 %323
        %325 = vrot.lane.b32.xlu0 %v303, 16
        %v326 = vpop.permute.xlu0 %325
        %327 = vrot.lane.b32.xlu0 %v304, 16
        %v328 = vpop.permute.xlu0 %327
        %vm337 = vcmask 195712
        %338 = vst.msk [vmem:[#allocation3] sm:$0xff] %vm337, %v314
        %339 = vst.msk [vmem:[#allocation3 + $0x8] sm:$0xff] %vm337, %v316
        %340 = vst.msk [vmem:[#allocation3 + $0x10] sm:$0xff] %vm337, %v318
        %341 = vst.msk [vmem:[#allocation3 + $0x18] sm:$0xff] %vm337, %v320
        %342 = vst.msk [vmem:[#allocation3 + $0x20] sm:$0xff] %vm337, %v322
        %343 = vst.msk [vmem:[#allocation3 + $0x28] sm:$0xff] %vm337, %v324
        %344 = vst.msk [vmem:[#allocation3 + $0x30] sm:$0xff] %vm337, %v326
        %345 = vst.msk [vmem:[#allocation3 + $0x38] sm:$0xff] %vm337, %v328
        %v346 = vld [vmem:[%s222] sm:$0xff]
        %v347 = vld [vmem:[%s222 + $0x10] sm:$0xff]
        %v348 = vld [vmem:[%s222 + $0x20] sm:$0xff]
        %v349 = vld [vmem:[%s222 + $0x30] sm:$0xff]
        %v350 = vld [vmem:[%s222 + $0x40] sm:$0xff]
        %v351 = vld [vmem:[%s222 + $0x50] sm:$0xff]
        %v352 = vld [vmem:[%s222 + $0x60] sm:$0xff]
        %v353 = vld [vmem:[%s222 + $0x70] sm:$0xff]
        %362 = vrot.lane.b32.xlu0 %v346, 24
        %v363 = vpop.permute.xlu0 %362
        %364 = vrot.lane.b32.xlu0 %v347, 24
        %v365 = vpop.permute.xlu0 %364
        %366 = vrot.lane.b32.xlu0 %v348, 24
        %v367 = vpop.permute.xlu0 %366
        %368 = vrot.lane.b32.xlu0 %v349, 24
        %v369 = vpop.permute.xlu0 %368
        %370 = vrot.lane.b32.xlu0 %v350, 24
        %v371 = vpop.permute.xlu0 %370
        %372 = vrot.lane.b32.xlu0 %v351, 24
        %v373 = vpop.permute.xlu0 %372
        %374 = vrot.lane.b32.xlu0 %v352, 24
        %v375 = vpop.permute.xlu0 %374
        %376 = vrot.lane.b32.xlu0 %v353, 24
        %v377 = vpop.permute.xlu0 %376
        %vm386 = vcmask 261312
        %387 = vst.msk [vmem:[#allocation3] sm:$0xff] %vm386, %v363
        %388 = vst.msk [vmem:[#allocation3 + $0x8] sm:$0xff] %vm386, %v365
        %389 = vst.msk [vmem:[#allocation3 + $0x10] sm:$0xff] %vm386, %v367
        %390 = vst.msk [vmem:[#allocation3 + $0x18] sm:$0xff] %vm386, %v369
        %391 = vst.msk [vmem:[#allocation3 + $0x20] sm:$0xff] %vm386, %v371
        %392 = vst.msk [vmem:[#allocation3 + $0x28] sm:$0xff] %vm386, %v373
        %393 = vst.msk [vmem:[#allocation3 + $0x30] sm:$0xff] %vm386, %v375
        %394 = vst.msk [vmem:[#allocation3 + $0x38] sm:$0xff] %vm386, %v377
        %v395 = vld [vmem:[%s222 + $0x1] sm:$0xff]
        %v396 = vld [vmem:[%s222 + $0x11] sm:$0xff]
        %v397 = vld [vmem:[%s222 + $0x21] sm:$0xff]
        %v398 = vld [vmem:[%s222 + $0x31] sm:$0xff]
        %v399 = vld [vmem:[%s222 + $0x41] sm:$0xff]
        %v400 = vld [vmem:[%s222 + $0x51] sm:$0xff]
        %v401 = vld [vmem:[%s222 + $0x61] sm:$0xff]
        %v402 = vld [vmem:[%s222 + $0x71] sm:$0xff]
        %411 = vrot.lane.b32.xlu0 %v395, 32
        %v412 = vpop.permute.xlu0 %411
        %413 = vrot.lane.b32.xlu0 %v396, 32
        %v414 = vpop.permute.xlu0 %413
        %415 = vrot.lane.b32.xlu0 %v397, 32
        %v416 = vpop.permute.xlu0 %415
        %417 = vrot.lane.b32.xlu0 %v398, 32
        %v418 = vpop.permute.xlu0 %417
        %419 = vrot.lane.b32.xlu0 %v399, 32
        %v420 = vpop.permute.xlu0 %419
        %421 = vrot.lane.b32.xlu0 %v400, 32
        %v422 = vpop.permute.xlu0 %421
        %423 = vrot.lane.b32.xlu0 %v401, 32
        %v424 = vpop.permute.xlu0 %423
        %425 = vrot.lane.b32.xlu0 %v402, 32
        %v426 = vpop.permute.xlu0 %425
        %vm435 = vcmask 326912
        %436 = vst.msk [vmem:[#allocation3] sm:$0xff] %vm435, %v412
        %437 = vst.msk [vmem:[#allocation3 + $0x8] sm:$0xff] %vm435, %v414
        %438 = vst.msk [vmem:[#allocation3 + $0x10] sm:$0xff] %vm435, %v416
        %439 = vst.msk [vmem:[#allocation3 + $0x18] sm:$0xff] %vm435, %v418
        %440 = vst.msk [vmem:[#allocation3 + $0x20] sm:$0xff] %vm435, %v420
        %441 = vst.msk [vmem:[#allocation3 + $0x28] sm:$0xff] %vm435, %v422
        %442 = vst.msk [vmem:[#allocation3 + $0x30] sm:$0xff] %vm435, %v424
        %443 = vst.msk [vmem:[#allocation3 + $0x38] sm:$0xff] %vm435, %v426
        %v444 = vld [vmem:[%s222 + $0x2] sm:$0xff]
        %v445 = vld [vmem:[%s222 + $0x12] sm:$0xff]
        %v446 = vld [vmem:[%s222 + $0x22] sm:$0xff]
        %v447 = vld [vmem:[%s222 + $0x32] sm:$0xff]
        %v448 = vld [vmem:[%s222 + $0x42] sm:$0xff]
        %v449 = vld [vmem:[%s222 + $0x52] sm:$0xff]
        %v450 = vld [vmem:[%s222 + $0x62] sm:$0xff]
        %v451 = vld [vmem:[%s222 + $0x72] sm:$0xff]
        %460 = vrot.lane.b32.xlu0 %v444, 40
        %v461 = vpop.permute.xlu0 %460
        %462 = vrot.lane.b32.xlu0 %v445, 40
        %v463 = vpop.permute.xlu0 %462
        %464 = vrot.lane.b32.xlu0 %v446, 40
        %v465 = vpop.permute.xlu0 %464
        %466 = vrot.lane.b32.xlu0 %v447, 40
        %v467 = vpop.permute.xlu0 %466
        %468 = vrot.lane.b32.xlu0 %v448, 40
        %v469 = vpop.permute.xlu0 %468
        %470 = vrot.lane.b32.xlu0 %v449, 40
        %v471 = vpop.permute.xlu0 %470
        %472 = vrot.lane.b32.xlu0 %v450, 40
        %v473 = vpop.permute.xlu0 %472
        %474 = vrot.lane.b32.xlu0 %v451, 40
        %v475 = vpop.permute.xlu0 %474
        %vm484 = vcmask 392512
        %485 = vst.msk [vmem:[#allocation3] sm:$0xff] %vm484, %v461
        %486 = vst.msk [vmem:[#allocation3 + $0x8] sm:$0xff] %vm484, %v463
        %487 = vst.msk [vmem:[#allocation3 + $0x10] sm:$0xff] %vm484, %v465
        %488 = vst.msk [vmem:[#allocation3 + $0x18] sm:$0xff] %vm484, %v467
        %489 = vst.msk [vmem:[#allocation3 + $0x20] sm:$0xff] %vm484, %v469
        %490 = vst.msk [vmem:[#allocation3 + $0x28] sm:$0xff] %vm484, %v471
        %491 = vst.msk [vmem:[#allocation3 + $0x30] sm:$0xff] %vm484, %v473
        %492 = vst.msk [vmem:[#allocation3 + $0x38] sm:$0xff] %vm484, %v475
        %s493 = scalar_lea.vmem [#allocation2], 32
        %v494 = vld [vmem:[%s493] sm:$0xff]
        %v495 = vld [vmem:[%s493 + $0x10] sm:$0xff]
        %v496 = vld [vmem:[%s493 + $0x20] sm:$0xff]
        %v497 = vld [vmem:[%s493 + $0x30] sm:$0xff]
        %v498 = vld [vmem:[%s493 + $0x40] sm:$0xff]
        %v499 = vld [vmem:[%s493 + $0x50] sm:$0xff]
        %v500 = vld [vmem:[%s493 + $0x60] sm:$0xff]
        %v501 = vld [vmem:[%s493 + $0x70] sm:$0xff]
        %510 = vrot.lane.b32.xlu0 %v494, 48
        %v511 = vpop.permute.xlu0 %510
        %512 = vrot.lane.b32.xlu0 %v495, 48
        %v513 = vpop.permute.xlu0 %512
        %514 = vrot.lane.b32.xlu0 %v496, 48
        %v515 = vpop.permute.xlu0 %514
        %516 = vrot.lane.b32.xlu0 %v497, 48
        %v517 = vpop.permute.xlu0 %516
        %518 = vrot.lane.b32.xlu0 %v498, 48
        %v519 = vpop.permute.xlu0 %518
        %520 = vrot.lane.b32.xlu0 %v499, 48
        %v521 = vpop.permute.xlu0 %520
        %522 = vrot.lane.b32.xlu0 %v500, 48
        %v523 = vpop.permute.xlu0 %522
        %524 = vrot.lane.b32.xlu0 %v501, 48
        %v525 = vpop.permute.xlu0 %524
        %vm534 = vcmask 458112
        %535 = vst.msk [vmem:[#allocation3] sm:$0xff] %vm534, %v511
        %536 = vst.msk [vmem:[#allocation3 + $0x8] sm:$0xff] %vm534, %v513
        %537 = vst.msk [vmem:[#allocation3 + $0x10] sm:$0xff] %vm534, %v515
        %538 = vst.msk [vmem:[#allocation3 + $0x18] sm:$0xff] %vm534, %v517
        %539 = vst.msk [vmem:[#allocation3 + $0x20] sm:$0xff] %vm534, %v519
        %540 = vst.msk [vmem:[#allocation3 + $0x28] sm:$0xff] %vm534, %v521
        %541 = vst.msk [vmem:[#allocation3 + $0x30] sm:$0xff] %vm534, %v523
        %542 = vst.msk [vmem:[#allocation3 + $0x38] sm:$0xff] %vm534, %v525
        %v543 = vld [vmem:[%s493 + $0x1] sm:$0xff]
        %v544 = vld [vmem:[%s493 + $0x11] sm:$0xff]
        %v545 = vld [vmem:[%s493 + $0x21] sm:$0xff]
        %v546 = vld [vmem:[%s493 + $0x31] sm:$0xff]
        %v547 = vld [vmem:[%s493 + $0x41] sm:$0xff]
        %v548 = vld [vmem:[%s493 + $0x51] sm:$0xff]
        %v549 = vld [vmem:[%s493 + $0x61] sm:$0xff]
        %v550 = vld [vmem:[%s493 + $0x71] sm:$0xff]
        %559 = vrot.lane.b32.xlu0 %v543, 56
        %v560 = vpop.permute.xlu0 %559
        %561 = vrot.lane.b32.xlu0 %v544, 56
        %v562 = vpop.permute.xlu0 %561
        %563 = vrot.lane.b32.xlu0 %v545, 56
        %v564 = vpop.permute.xlu0 %563
        %565 = vrot.lane.b32.xlu0 %v546, 56
        %v566 = vpop.permute.xlu0 %565
        %567 = vrot.lane.b32.xlu0 %v547, 56
        %v568 = vpop.permute.xlu0 %567
        %569 = vrot.lane.b32.xlu0 %v548, 56
        %v570 = vpop.permute.xlu0 %569
        %571 = vrot.lane.b32.xlu0 %v549, 56
        %v572 = vpop.permute.xlu0 %571
        %573 = vrot.lane.b32.xlu0 %v550, 56
        %v574 = vpop.permute.xlu0 %573
        %vm583 = vcmask 523712
        %584 = vst.msk [vmem:[#allocation3] sm:$0xff] %vm583, %v560
        %585 = vst.msk [vmem:[#allocation3 + $0x8] sm:$0xff] %vm583, %v562
        %586 = vst.msk [vmem:[#allocation3 + $0x10] sm:$0xff] %vm583, %v564
        %587 = vst.msk [vmem:[#allocation3 + $0x18] sm:$0xff] %vm583, %v566
        %588 = vst.msk [vmem:[#allocation3 + $0x20] sm:$0xff] %vm583, %v568
        %589 = vst.msk [vmem:[#allocation3 + $0x28] sm:$0xff] %vm583, %v570
        %590 = vst.msk [vmem:[#allocation3 + $0x30] sm:$0xff] %vm583, %v572
        %591 = vst.msk [vmem:[#allocation3 + $0x38] sm:$0xff] %vm583, %v574
        %v592 = vld [vmem:[%s493 + $0x2] sm:$0xff]
        %v593 = vld [vmem:[%s493 + $0x12] sm:$0xff]
        %v594 = vld [vmem:[%s493 + $0x22] sm:$0xff]
        %v595 = vld [vmem:[%s493 + $0x32] sm:$0xff]
        %v596 = vld [vmem:[%s493 + $0x42] sm:$0xff]
        %v597 = vld [vmem:[%s493 + $0x52] sm:$0xff]
        %v598 = vld [vmem:[%s493 + $0x62] sm:$0xff]
        %v599 = vld [vmem:[%s493 + $0x72] sm:$0xff]
        %608 = vrot.lane.b32.xlu0 %v592, 64
        %v609 = vpop.permute.xlu0 %608
        %610 = vrot.lane.b32.xlu0 %v593, 64
        %v611 = vpop.permute.xlu0 %610
        %612 = vrot.lane.b32.xlu0 %v594, 64
        %v613 = vpop.permute.xlu0 %612
        %614 = vrot.lane.b32.xlu0 %v595, 64
        %v615 = vpop.permute.xlu0 %614
        %616 = vrot.lane.b32.xlu0 %v596, 64
        %v617 = vpop.permute.xlu0 %616
        %618 = vrot.lane.b32.xlu0 %v597, 64
        %v619 = vpop.permute.xlu0 %618
        %620 = vrot.lane.b32.xlu0 %v598, 64
        %v621 = vpop.permute.xlu0 %620
        %622 = vrot.lane.b32.xlu0 %v599, 64
        %v623 = vpop.permute.xlu0 %622
        %vm632 = vcmask 589312
        %633 = vst.msk [vmem:[#allocation3] sm:$0xff] %vm632, %v609
        %634 = vst.msk [vmem:[#allocation3 + $0x8] sm:$0xff] %vm632, %v611
        %635 = vst.msk [vmem:[#allocation3 + $0x10] sm:$0xff] %vm632, %v613
        %636 = vst.msk [vmem:[#allocation3 + $0x18] sm:$0xff] %vm632, %v615
        %637 = vst.msk [vmem:[#allocation3 + $0x20] sm:$0xff] %vm632, %v617
        %638 = vst.msk [vmem:[#allocation3 + $0x28] sm:$0xff] %vm632, %v619
        %639 = vst.msk [vmem:[#allocation3 + $0x30] sm:$0xff] %vm632, %v621
        %640 = vst.msk [vmem:[#allocation3 + $0x38] sm:$0xff] %vm632, %v623
        %v641 = vld [vmem:[#allocation3] sm:$0xff]
        %v642 = vld [vmem:[#allocation3 + $0x8] sm:$0xff]
        %v643 = vld [vmem:[#allocation3 + $0x10] sm:$0xff]
        %v644 = vld [vmem:[#allocation3 + $0x18] sm:$0xff]
        %v645 = vld [vmem:[#allocation3 + $0x20] sm:$0xff]
        %v646 = vld [vmem:[#allocation3 + $0x28] sm:$0xff]
        %v647 = vld [vmem:[#allocation3 + $0x30] sm:$0xff]
        %v648 = vld [vmem:[#allocation3 + $0x38] sm:$0xff]
        %v649 = vpack.c.bf16 %v642, %v641
        %v650 = vpack.c.bf16 %v644, %v643
        %v651 = vpack.c.bf16 %v646, %v645
        %v652 = vpack.c.bf16 %v648, %v647
        %v653 = vld [vmem:[%s1] sm:$0xf]
        %v654 = vld [vmem:[%s1 + $0x4] sm:$0xf]
        %v655 = vld [vmem:[%s1 + $0x8] sm:$0xf]
        %v656 = vld [vmem:[%s1 + $0xc] sm:$0xf]
        %v657 = vld [vmem:[%s1 + $0x10] sm:$0xf]
        %v658 = vld [vmem:[%s1 + $0x14] sm:$0xf]
        %v659 = vld [vmem:[%s1 + $0x18] sm:$0xf]
        %v660 = vld [vmem:[%s1 + $0x1c] sm:$0xf]
        %v661 = vld [vmem:[%s1 + $0x20] sm:$0xf]
        %v671 = vunpack.c.l.b16 %v653
        %v672 = vunpack.c.l.b16 %v654
        %v673 = vunpack.c.l.b16 %v655
        %v674 = vunpack.c.l.b16 %v656
        %v675 = vunpack.c.l.b16 %v657
        %v676 = vunpack.c.l.b16 %v658
        %v677 = vunpack.c.l.b16 %v659
        %v678 = vunpack.c.l.b16 %v660
        %v679 = vunpack.c.l.b16 %v661
        %v680 = vpack.c.b16 %v672, %v671
        %v681 = vpack.c.b16 %v674, %v673
        %v682 = vpack.c.b16 %v676, %v675
        %v683 = vpack.c.b16 %v678, %v677
        %v684 = vpack.c.b16 %v679, %v679
        %vm689 = vcmask 588800
        %v691 = vsel %vm689, %v649, 0
        %v694 = vsel %vm689, %v650, 0
        %v697 = vsel %vm689, %v651, 0
        %v700 = vsel %vm689, %v652, 0
        %vm702 = vcmask 1043456
        %v704 = vsel %vm702, %v684, 0
        %706 = vmatprep.subr.bf16.mxu0 0
        %707 = vmatpush1.bf16.msra.mxu0 %v680
        %708 = vmatprep.subr.bf16.mxu0 0
        %709 = vmatpush1.bf16.msra.mxu0 %v681
        %710 = vmatprep.subr.bf16.mxu0 0
        %711 = vmatpush1.bf16.msra.mxu0 %v682
        %712 = vmatprep.subr.bf16.mxu0 0
        %713 = vmatpush1.bf16.msra.mxu0 %v683
        %714 = vmatprep.subr.bf16.mxu0 0
        %715 = vmatpush1.bf16.msra.mxu0 %v704
        %716 = vmatprep.subr.bf16.mxu0 0
        %717 = vmatpush1.bf16.msra.mxu0 0
        %718 = vmatprep.subr.bf16.mxu0 0
        %719 = vmatpush1.bf16.msra.mxu0 0
        %720 = vmatprep.subr.bf16.mxu0 0
        %721 = vmatpush1.bf16.msra.mxu0 0
        %722 = vmatprep.subr.bf16.mxu0 0
        %723 = vmatpush1.bf16.msra.mxu0 0
        %724 = vmatprep.subr.bf16.mxu0 0
        %725 = vmatpush1.bf16.msra.mxu0 0
        %726 = vmatprep.subr.bf16.mxu0 0
        %727 = vmatpush1.bf16.msra.mxu0 0
        %728 = vmatprep.subr.bf16.mxu0 0
        %729 = vmatpush1.bf16.msra.mxu0 0
        %730 = vmatprep.subr.bf16.mxu0 0
        %731 = vmatpush1.bf16.msra.mxu0 0
        %732 = vmatprep.subr.bf16.mxu0 0
        %733 = vmatpush1.bf16.msra.mxu0 0
        %734 = vmatprep.subr.bf16.mxu0 0
        %735 = vmatpush1.bf16.msra.mxu0 0
        %736 = vmatprep.subr.bf16.mxu0 0
        %737 = vmatpush1.bf16.msra.mxu0 0
        %738 = vmatprep.mubr.bf16.mxu0 0
        %739 = vmatmul.mubr.bf16.gmra.mrb[0].mxu0 %v691
        %v740 = vpop.f32.mrb[0].mxu0
        %v741 = vadd.f32 0.0, %v740
        %v742 = vpop.f32.mrb[0].mxu0
        %v743 = vpop.f32.mrb[0].mxu0
        %v744 = vadd.f32 0.0, %v743
        %v745 = vpop.f32.mrb[0].mxu0
        %746 = vmatprep.mubr.bf16.mxu0 0
        %747 = vmatmul.mubr.bf16.gmra.mrb[0].mxu0 %v694
        %v748 = vpop.f32.mrb[0].mxu0
        %v749 = vadd.f32 0.0, %v748
        %v750 = vpop.f32.mrb[0].mxu0
        %v751 = vpop.f32.mrb[0].mxu0
        %v752 = vadd.f32 0.0, %v751
        %v753 = vpop.f32.mrb[0].mxu0
        %754 = vmatprep.mubr.bf16.mxu0 0
        %755 = vmatmul.mubr.bf16.gmra.mrb[0].mxu0 %v697
        %v756 = vpop.f32.mrb[0].mxu0
        %v757 = vadd.f32 0.0, %v756
        %v758 = vpop.f32.mrb[0].mxu0
        %v759 = vpop.f32.mrb[0].mxu0
        %v760 = vadd.f32 0.0, %v759
        %v761 = vpop.f32.mrb[0].mxu0
        %762 = vmatprep.mubr.bf16.mxu0 0
        %763 = vmatmul.mubr.bf16.gmra.mrb[0].mxu0 %v700
        %v764 = vpop.f32.mrb[0].mxu0
        %v765 = vadd.f32 0.0, %v764
        %v766 = vpop.f32.mrb[0].mxu0
        %v767 = vpop.f32.mrb[0].mxu0
        %v768 = vadd.f32 0.0, %v767
        %v769 = vpop.f32.mrb[0].mxu0
        %770 = vdwg.mxu0
        %v771 = vld [vmem:[#allocation5] sm:$0x1]
        %v772 = vsel %vm223, %v741, 0.0
        %v773 = vsel %vm223, %v744, 0.0
        %v774 = vadd.f32 %v772, %v773
        %v775 = vsel %vm223, %v749, 0.0
        %v776 = vadd.f32 %v774, %v775
        %v777 = vsel %vm223, %v752, 0.0
        %v778 = vadd.f32 %v776, %v777
        %v779 = vsel %vm223, %v757, 0.0
        %v780 = vadd.f32 %v778, %v779
        %v781 = vsel %vm223, %v760, 0.0
        %v782 = vadd.f32 %v780, %v781
        %v783 = vsel %vm223, %v765, 0.0
        %v784 = vadd.f32 %v782, %v783
        %v785 = vsel %vm223, %v768, 0.0
        %v786 = vadd.f32 %v784, %v785
        %v787 = vrot.slane %v786, 4
        %v788 = vadd.f32 %v786, %v787
        %v789 = vrot.slane %v788, 2
        %v790 = vadd.f32 %v788, %v789
        %v791 = vrot.slane %v790, 1
        %v792 = vadd.f32 %v790, %v791
        %v793 = vadd.f32 %v771, %v792
        %vm794 = vcmask 57344
        %795 = vst.msk [vmem:[#allocation5] sm:$0x1] %vm794, %v793
        %v796 = vld [vmem:[#allocation6] sm:$0x1]
        %v797 = vmul.f32 %v741, %v741
        %v798 = vmul.f32 %v744, %v744
        %v799 = vmul.f32 %v749, %v749
        %v800 = vmul.f32 %v752, %v752
        %v801 = vmul.f32 %v757, %v757
        %v802 = vmul.f32 %v760, %v760
        %v803 = vmul.f32 %v765, %v765
        %v804 = vmul.f32 %v768, %v768
        %v805 = vsel %vm223, %v797, 0.0
        %v806 = vsel %vm223, %v798, 0.0
        %v807 = vadd.f32 %v805, %v806
        %v808 = vsel %vm223, %v799, 0.0
        %v809 = vadd.f32 %v807, %v808
        %v810 = vsel %vm223, %v800, 0.0
        %v811 = vadd.f32 %v809, %v810
        %v812 = vsel %vm223, %v801, 0.0
        %v813 = vadd.f32 %v811, %v812
        %v814 = vsel %vm223, %v802, 0.0
        %v815 = vadd.f32 %v813, %v814
        %v816 = vsel %vm223, %v803, 0.0
        %v817 = vadd.f32 %v815, %v816
        %v818 = vsel %vm223, %v804, 0.0
        %v819 = vadd.f32 %v817, %v818
        %v820 = vrot.slane %v819, 4
        %v821 = vadd.f32 %v819, %v820
        %v822 = vrot.slane %v821, 2
        %v823 = vadd.f32 %v821, %v822
        %v824 = vrot.slane %v823, 1
        %v825 = vadd.f32 %v823, %v824
        %v826 = vadd.f32 %v796, %v825
        %827 = vst.msk [vmem:[#allocation6] sm:$0x1] %vm794, %v826
        %s828 = smul.u32 %s16, 64
        %s829 = scalar_lea.vmem [#allocation4], %s828
        %830 = vst.msk [vmem:[%s829] sm:$0xff] %vm223, %v741
        %831 = vst.msk [vmem:[%s829 + $0x8] sm:$0xff] %vm223, %v744
        %832 = vst.msk [vmem:[%s829 + $0x10] sm:$0xff] %vm223, %v749
        %833 = vst.msk [vmem:[%s829 + $0x18] sm:$0xff] %vm223, %v752
        %834 = vst.msk [vmem:[%s829 + $0x20] sm:$0xff] %vm223, %v757
        %835 = vst.msk [vmem:[%s829 + $0x28] sm:$0xff] %vm223, %v760
        %836 = vst.msk [vmem:[%s829 + $0x30] sm:$0xff] %vm223, %v765
        %837 = vst.msk [vmem:[%s829 + $0x38] sm:$0xff] %vm223, %v768
        %p838 = scmp.eq.s32.totalorder %s16, 1
        // Predicated region
        $region41: #{encode_down.3} parent=35 // pred_check
          %p839 = pneg %p838
        $region42: #{encode_down.3} parent=35 // pred_check_branch
          %841 = sbr.rel (%p839) target = $region44
        $region43: #{encode_down.3} parent=35 // pred_region
          %v842 = vld [vmem:[#allocation5] sm:$0x1]
          %v843 = vmul.f32 %v842, 0.0078125
          %v844 = vld [vmem:[#allocation6] sm:$0x1]
          %v845 = vmul.f32 %v844, 0.0078125
          %v846 = vmul.f32 %v843, %v843
          %v847 = vsub.f32 %v845, %v846
          %v848 = vld [vmem:[%s2] sm:$0x1]
          %v849 = vadd.f32 %v847, 1e-05
          %v850 = vrsqrt.pop %v849
          %v851 = vmul.f32 %v848, %v850
          %v852 = vld [vmem:[%s3] sm:$0x1]
          %v853 = vmul.f32 %v843, %v851
          %v854 = vsub.f32 %v852, %v853
          %v855 = vld [vmem:[#allocation4] sm:$0xff]
          %v856 = vld [vmem:[#allocation4 + $0x8] sm:$0xff]
          %v857 = vld [vmem:[#allocation4 + $0x10] sm:$0xff]
          %v858 = vld [vmem:[#allocation4 + $0x18] sm:$0xff]
          %v859 = vld [vmem:[#allocation4 + $0x20] sm:$0xff]
          %v860 = vld [vmem:[#allocation4 + $0x28] sm:$0xff]
          %v861 = vld [vmem:[#allocation4 + $0x30] sm:$0xff]
          %v862 = vld [vmem:[#allocation4 + $0x38] sm:$0xff]
          %v863 = vld [vmem:[#allocation4 + $0x40] sm:$0xff]
          %v864 = vld [vmem:[#allocation4 + $0x48] sm:$0xff]
          %v865 = vld [vmem:[#allocation4 + $0x50] sm:$0xff]
          %v866 = vld [vmem:[#allocation4 + $0x58] sm:$0xff]
          %v867 = vld [vmem:[#allocation4 + $0x60] sm:$0xff]
          %v868 = vld [vmem:[#allocation4 + $0x68] sm:$0xff]
          %v869 = vld [vmem:[#allocation4 + $0x70] sm:$0xff]
          %v870 = vld [vmem:[#allocation4 + $0x78] sm:$0xff]
          %v872 = vlaneseq
          %v873 = vshrl.u32 %v872, 7
          %v874 = vsub.s32 0, %v873
          %v875 = vrot.slane %v851, %v874
          %v877 = vmul.f32 %v855, %v875
          %v878 = vmul.f32 %v856, %v875
          %v879 = vmul.f32 %v857, %v875
          %v880 = vmul.f32 %v858, %v875
          %v881 = vmul.f32 %v859, %v875
          %v882 = vmul.f32 %v860, %v875
          %v883 = vmul.f32 %v861, %v875
          %v884 = vmul.f32 %v862, %v875
          %v885 = vmul.f32 %v863, %v875
          %v886 = vmul.f32 %v864, %v875
          %v887 = vmul.f32 %v865, %v875
          %v888 = vmul.f32 %v866, %v875
          %v889 = vmul.f32 %v867, %v875
          %v890 = vmul.f32 %v868, %v875
          %v891 = vmul.f32 %v869, %v875
          %v892 = vmul.f32 %v870, %v875
          %v894 = vlaneseq
          %v895 = vshrl.u32 %v894, 7
          %v896 = vsub.s32 0, %v895
          %v897 = vrot.slane %v854, %v896
          %v899 = vadd.f32 %v877, %v897
          %v900 = vadd.f32 %v878, %v897
          %v901 = vadd.f32 %v879, %v897
          %v902 = vadd.f32 %v880, %v897
          %v903 = vadd.f32 %v881, %v897
          %v904 = vadd.f32 %v882, %v897
          %v905 = vadd.f32 %v883, %v897
          %v906 = vadd.f32 %v884, %v897
          %v907 = vadd.f32 %v885, %v897
          %v908 = vadd.f32 %v886, %v897
          %v909 = vadd.f32 %v887, %v897
          %v910 = vadd.f32 %v888, %v897
          %v911 = vadd.f32 %v889, %v897
          %v912 = vadd.f32 %v890, %v897
          %v913 = vadd.f32 %v891, %v897
          %v914 = vadd.f32 %v892, %v897
          %v915 = vmax.f32 %v899, 0.0
          %v916 = vmax.f32 %v900, 0.0
          %v917 = vmax.f32 %v901, 0.0
          %v918 = vmax.f32 %v902, 0.0
          %v919 = vmax.f32 %v903, 0.0
          %v920 = vmax.f32 %v904, 0.0
          %v921 = vmax.f32 %v905, 0.0
          %v922 = vmax.f32 %v906, 0.0
          %v923 = vmax.f32 %v907, 0.0
          %v924 = vmax.f32 %v908, 0.0
          %v925 = vmax.f32 %v909, 0.0
          %v926 = vmax.f32 %v910, 0.0
          %v927 = vmax.f32 %v911, 0.0
          %v928 = vmax.f32 %v912, 0.0
          %v929 = vmax.f32 %v913, 0.0
          %v930 = vmax.f32 %v914, 0.0
          %931 = vst.msk [vmem:[#allocation7] sm:$0xff] %vm223, %v915
          %932 = vst.msk [vmem:[#allocation7 + $0x8] sm:$0xff] %vm223, %v916
          %933 = vst.msk [vmem:[#allocation7 + $0x10] sm:$0xff] %vm223, %v917
          %934 = vst.msk [vmem:[#allocation7 + $0x18] sm:$0xff] %vm223, %v918
          %935 = vst.msk [vmem:[#allocation7 + $0x20] sm:$0xff] %vm223, %v919
          %936 = vst.msk [vmem:[#allocation7 + $0x28] sm:$0xff] %vm223, %v920
          %937 = vst.msk [vmem:[#allocation7 + $0x30] sm:$0xff] %vm223, %v921
          %938 = vst.msk [vmem:[#allocation7 + $0x38] sm:$0xff] %vm223, %v922
          %939 = vst.msk [vmem:[#allocation7 + $0x40] sm:$0xff] %vm223, %v923
          %940 = vst.msk [vmem:[#allocation7 + $0x48] sm:$0xff] %vm223, %v924
          %941 = vst.msk [vmem:[#allocation7 + $0x50] sm:$0xff] %vm223, %v925
          %942 = vst.msk [vmem:[#allocation7 + $0x58] sm:$0xff] %vm223, %v926
          %943 = vst.msk [vmem:[#allocation7 + $0x60] sm:$0xff] %vm223, %v927
          %944 = vst.msk [vmem:[#allocation7 + $0x68] sm:$0xff] %vm223, %v928
          %945 = vst.msk [vmem:[#allocation7 + $0x70] sm:$0xff] %vm223, %v929
          %946 = vst.msk [vmem:[#allocation7 + $0x78] sm:$0xff] %vm223, %v930
        $region44: #{encode_down.3} parent=35 // pred_fallthru
          _
        // Predicated region
        $region45: #{encode_down.3} parent=35 // pred_check
          %p947 = pneg %p118
        $region46: #{encode_down.3} parent=35 // pred_check_branch
          %949 = sbr.rel (%p947) target = $region48
        $region47: #{encode_down.3} parent=35 // pred_region
          %s951 = ssub.s32 2048, 2048
          %952 = vsyncadd [#allocation8], %s951
          %s953 = sshll.u32 [#allocation7], 4
          %s954 = int_to_ptr.vmem [resolvable:$true] %s953
          %959 = dma.vmem_to_hbm [thread:$0]  %s954, 2048, %s4, [#allocation8], 128, 128, 8
        $region48: #{encode_down.3} parent=35 // pred_fallthru
          _
        // Predicated region
        $region49: #{encode_down.3} parent=35 // pred_check
          %p960 = pneg %p118
        $region50: #{encode_down.3} parent=35 // pred_check_branch
          %962 = sbr.rel (%p960) target = $region52
        $region51: #{encode_down.3} parent=35 // pred_region
          %963 = dma.done [#allocation8], 2048
        $region52: #{encode_down.3} parent=35 // pred_fallthru
          _
      $region36: #{encode_down.3} parent=5 // pred_fallthru
        _
      %p964 = scmp.le.s32.totalorder 2, %s11
      // Predicated region
      $region53: #{encode_down.3} parent=5 // pred_check
        %p965 = pneg %p964
      $region54: #{encode_down.3} parent=5 // pred_check_branch
        %967 = sbr.rel (%p965) target = $region56
      $region55: #{encode_down.3} parent=5 // pred_region
        %s968 = ssub.s32 %s11, 2
      $region56: #{encode_down.3} parent=5 // pred_fallthru
        _
    $region6: #{encode_down.3} parent=1 // loop_footer
      %s15 = sadd.s32 1, %s11
    $region7: #{encode_down.3} parent=1 // loop_footer_branch
      %10 = sbr.rel target = $region3
    $region8: #{encode_down.3} parent=1 // loop_exit
      _
    %969 = vsyncpa [#allocation8], 1
    %s970 = scalar_lea.sflag [#allocation8], 1
    %971 = vsyncpa %s970, 1

</llo_original>
